<compile_context>
chip_gen: v7x
topology: tpu7x:2x2x1
jax: 0.10.0
libtpu: 0.0.40
codegen_flags: <defaults>
</compile_context>

<pallas_src>
import numpy as np
import jax
import jax.numpy as jnp
from jax import lax
from jax.experimental import pallas as pl
from jax.experimental.pallas import tpu as pltpu

# ---------------- static "module params" (Voxelization has no learned weights) ----
VOXEL_SIZE = (0.4, 0.4, 2.0)
PC_RANGE   = (0.0, 0.0, -1.0, 6.4, 6.4, 1.0)   # (xmin, ymin, zmin, xmax, ymax, zmax)
MAX_PTS    = 8                                  # max_num_points per pillar
MAX_VOXELS = 32                                 # max_voxels per point cloud
C          = 4                                  # point features (x, y, z, r)
S          = MAX_VOXELS * MAX_PTS               # voxel "slots" per cloud

GX = int(round((PC_RANGE[3] - PC_RANGE[0]) / VOXEL_SIZE[0]))
GY = int(round((PC_RANGE[4] - PC_RANGE[1]) / VOXEL_SIZE[1]))
GZ = int(round((PC_RANGE[5] - PC_RANGE[2]) / VOXEL_SIZE[2]))
GRID_TOTAL = GX * GY * GZ
# TODO(synk): the dense SMEM dedup table scales as GX*GY*GZ; for full-size grids a
# hashed / generation-tagged table (or pl.get_global persistence) would be needed.

_INV = (float(np.float32(1.0 / VOXEL_SIZE[0])),
        float(np.float32(1.0 / VOXEL_SIZE[1])),
        float(np.float32(1.0 / VOXEL_SIZE[2])))
_XMIN, _YMIN, _ZMIN = PC_RANGE[0], PC_RANGE[1], PC_RANGE[2]


def _divmod_const(v, d):
    """divmod of a non-negative traced int32 scalar by a positive Python int."""
    if d & (d - 1) == 0:                       # power of two -> shift/mask (no div)
        sh = int(d).bit_length() - 1
        return jnp.right_shift(v, sh), jnp.bitwise_and(v, d - 1)
    return v // d, v - (v // d) * d            # generic path (scalar s32 division)


# ------------------------------ Kernel A: per-point voxel key ---------------------
def _key_kernel(pts_ref, key_ref):
    # pts_ref: (1, C, n_pad) f32 ;  key_ref: (1, 1, n_pad) i32
    x = pts_ref[0, 0:1, :]
    y = pts_ref[0, 1:2, :]
    z = pts_ref[0, 2:3, :]
    cxf = jnp.floor((x - _XMIN) * _INV[0])
    cyf = jnp.floor((y - _YMIN) * _INV[1])
    czf = jnp.floor((z - _ZMIN) * _INV[2])
    # validity decided in float domain (no int32 overflow on far-away/pad points)
    valid = ((cxf >= 0.0) & (cxf < float(GX)) &
             (cyf >= 0.0) & (cyf < float(GY)) &
             (czf >= 0.0) & (czf < float(GZ)))
    cx = jnp.clip(cxf, 0.0, float(GX - 1)).astype(jnp.int32)
    cy = jnp.clip(cyf, 0.0, float(GY - 1)).astype(jnp.int32)
    cz = jnp.clip(czf, 0.0, float(GZ - 1)).astype(jnp.int32)
    key = (cz * GY + cy) * GX + cx
    key_ref[0] = jnp.where(valid, key, -1)


def _compute_keys(pts_t):
    B, C_, n_pad = pts_t.shape
    # TODO(synk): for realistic point counts add a second grid axis over lane
    # chunks of N so the block stays well under the v7x 64 MiB VMEM.
    return pl.pallas_call(
        _key_kernel,
        out_shape=jax.ShapeDtypeStruct((B, 1, n_pad), jnp.int32),
        grid=(B,),
        in_specs=[pl.BlockSpec((1, C_, n_pad), lambda b: (b, 0, 0))],
        out_specs=pl.BlockSpec((1, 1, n_pad), lambda b: (b, 0, 0)),
        compiler_params=pltpu.CompilerParams(dimension_semantics=("parallel",)),
    )(pts_t)


# ------------------------------ Kernel B: sequential voxel assignment -------------
def _assign_kernel(keys_ref, src_ref, coors_ref, npts_ref, nvox_ref,
                   table_ref, used_ref):
    # keys_ref : SMEM (B, n_pad) i32                 (key, -1 = dropped)
    # src_ref  : SMEM (B, S) i32  out                (slot -> source point index)
    # coors_ref: SMEM (B, 3*MAX_VOXELS) i32 out      ((z, y, x) per opened voxel)
    # npts_ref : SMEM (B, MAX_VOXELS) i32 out
    # nvox_ref : SMEM (B,) i32 out
    # table_ref: SMEM (GRID_TOTAL,) i32 scratch      (flat key -> voxel id, -1 unused)
    # used_ref : SMEM (MAX_VOXELS,) i32 scratch      (keys opened this cloud)
    B_, n_pad = keys_ref.shape

    # table init ONCE per call (not per cloud); targeted cleanup after each cloud.
    def _init_table(i, c):
        table_ref[i] = -1
        return c
    lax.fori_loop(0, GRID_TOTAL, _init_table, 0)

    def _per_cloud(b, c0):
        def _zero_npts(v, c):
            npts_ref[b, v] = 0
            return c
        lax.fori_loop(0, MAX_VOXELS, _zero_npts, 0)

        def _point_body(n, nv):
            key = keys_ref[b, n]
            valid = key >= 0
            entry = table_ref[jnp.maximum(key, 0)]          # single table load
            is_new = valid & (entry < 0) & (nv < MAX_VOXELS)
            vid = jnp.where(is_new, nv, entry)

            @pl.when(is_new)
            def _():                                        # open a new voxel
                table_ref[key] = nv
                used_ref[nv] = key
                cz, rem = _divmod_const(key, GY * GX)       # coords only on this path
                cy, cx = _divmod_const(rem, GX)
                coors_ref[b, 3 * nv + 0] = cz
                coors_ref[b, 3 * nv + 1] = cy
                coors_ref[b, 3 * nv + 2] = cx

            accept = valid & (vid >= 0)

            @pl.when(accept)
            def _():
                cnt = npts_ref[b, vid]

                @pl.when(cnt < MAX_PTS)
                def _():                                    # record slot index only
                    src_ref[b, vid * MAX_PTS + cnt] = n
                    npts_ref[b, vid] = cnt + 1

            return jnp.where(is_new, nv + 1, nv)

        nv_final = lax.fori_loop(0, n_pad, _point_body, jnp.int32(0))
        nvox_ref[b] = nv_final

        def _cleanup(v, c):                                 # reset only touched entries
            @pl.when(v < nv_final)
            def _():
                table_ref[used_ref[v]] = -1
            return c
        lax.fori_loop(0, MAX_VOXELS, _cleanup, 0)
        return c0

    # TODO(synk): on v7x the clouds could be sharded across the 2 TensorCores
    # (grid over B, per-core table scratch); kept sequential here for simplicity.
    lax.fori_loop(0, B_, _per_cloud, 0)


def _assign(keys2):
    B, _ = keys2.shape
    smem = pl.BlockSpec(memory_space=pltpu.MemorySpace.SMEM)
    return pl.pallas_call(
        _assign_kernel,
        out_shape=(
            jax.ShapeDtypeStruct((B, S), jnp.int32),
            jax.ShapeDtypeStruct((B, 3 * MAX_VOXELS), jnp.int32),
            jax.ShapeDtypeStruct((B, MAX_VOXELS), jnp.int32),
            jax.ShapeDtypeStruct((B,), jnp.int32),
        ),
        in_specs=[smem],
        out_specs=(smem, smem, smem, smem),
        scratch_shapes=[pltpu.SMEM((GRID_TOTAL,), jnp.int32),
                        pltpu.SMEM((MAX_VOXELS,), jnp.int32)],
    )(keys2)


# ------------------------------ Kernel C: vectorized feature gather ---------------
def _gather_kernel(pts_ref, src_ref, nrep_ref, out_ref):
    # pts_ref: (1, C, n_pad) f32; src_ref/nrep_ref: (1, 1, S) i32; out_ref: (1, C, S) f32
    pts = pts_ref[0]                          # (C, n_pad)
    src = src_ref[0]                          # (1, S)
    nrep = nrep_ref[0]                        # (1, S)  npts repeated per slot
    n_pad = pts.shape[1]
    s = src.shape[1]
    slot = lax.broadcasted_iota(jnp.int32, (1, s), 1)
    if MAX_PTS & (MAX_PTS - 1) == 0:
        p_idx = jnp.bitwise_and(slot, MAX_PTS - 1)
    else:
        p_idx = slot % MAX_PTS
    src_m = jnp.where(p_idx < nrep, src, -1)  # gate empty slots / garbage indices
    n_iota = lax.broadcasted_iota(jnp.int32, (n_pad, s), 0)
    onehot = (n_iota == src_m).astype(jnp.float32)          # (n_pad, S), <=1 hit/col
    out_ref[0] = jnp.dot(pts, onehot,
                         preferred_element_type=jnp.float32,
                         precision=lax.Precision.HIGHEST)   # exact copy of features


def _gather_voxels(pts_t, src_slot, nrep):
    B, C_, n_pad = pts_t.shape
    return pl.pallas_call(
        _gather_kernel,
        out_shape=jax.ShapeDtypeStruct((B, C_, S), jnp.float32),
        grid=(B,),
        in_specs=[pl.BlockSpec((1, C_, n_pad), lambda b: (b, 0, 0)),
                  pl.BlockSpec((1, 1, S), lambda b: (b, 0, 0)),
                  pl.BlockSpec((1, 1, S), lambda b: (b, 0, 0))],
        out_specs=pl.BlockSpec((1, C_, S), lambda b: (b, 0, 0)),
        compiler_params=pltpu.CompilerParams(dimension_semantics=("parallel",)),
    )(pts_t, src_slot, nrep)


# ------------------------------ batched device pipeline ---------------------------
def _voxelize_batch(pts_t):
    """pts_t: (B, C, n_pad) f32 -> (voxels, coors_zyx, npts, nvox), padded to MAX_VOXELS."""
    B = pts_t.shape[0]
    keys = _compute_keys(pts_t).reshape(B, -1)                    # (B, n_pad) i32
    src, coors_flat, npts, nvox = _assign(keys)
    nrep = jnp.repeat(npts, MAX_PTS, axis=1).reshape(B, 1, S)     # layout plumbing
    vox_t = _gather_voxels(pts_t, src.reshape(B, 1, S), nrep)     # (B, C, S)
    voxels = jnp.transpose(vox_t, (0, 2, 1)).reshape(B, MAX_VOXELS, MAX_PTS, C)
    coors = coors_flat.reshape(B, MAX_VOXELS, 3)
    return voxels, coors, npts, nvox


_voxelize_jit = jax.jit(_voxelize_batch)


# ------------------------------ VoxelLayer.forward equivalent ---------------------
def voxel_layer_forward(batched_pts):
    """batched_pts: list of (Ni, 4) arrays.
    Returns (pillars (P, max_pts, 4), coors_batch (P, 4) = (b, z, y, x), npoints (P,))."""
    bsz = len(batched_pts)
    n_max = max(int(p.shape[0]) for p in batched_pts)
    n_pad = max(128, -(-n_max // 128) * 128)
    pad_val = np.float32(PC_RANGE[0] - 10.0)        # just outside the range (no 1e9)
    padded = []
    for p in batched_pts:
        p = jnp.asarray(p, jnp.float32)
        n = p.shape[0]
        if n < n_pad:
            p = jnp.concatenate([p, jnp.full((n_pad - n, C), pad_val, jnp.float32)], 0)
        padded.append(p)
    pts_t = jnp.transpose(jnp.stack(padded, 0), (0, 2, 1))        # (B, C, n_pad)

    voxels, coors, npts, nvox = _voxelize_jit(pts_t)
    nvox_h = np.asarray(jax.device_get(nvox))                     # single host sync

    pillars_l, coors_l, np_l = [], [], []
    for i in range(bsz):
        k = int(nvox_h[i])
        pillars_l.append(voxels[i, :k])
        coors_l.append(jnp.concatenate(
            [jnp.full((k, 1), i, jnp.int32), coors[i, :k]], axis=1))
        np_l.append(npts[i, :k])
    pillars = jnp.concatenate(pillars_l, axis=0)
    coors_batch = jnp.concatenate(coors_l, axis=0)
    npoints = jnp.concatenate(np_l, axis=0)
    return pillars, coors_batch, npoints


# ------------------------------ numpy reference (for checking) --------------------
def _ref_hard_voxelize(pts_np):
    table, voxels, coors, npts = {}, [], [], []
    xmin, ymin, zmin = (np.float32(PC_RANGE[0]), np.float32(PC_RANGE[1]),
                        np.float32(PC_RANGE[2]))
    inv = (np.float32(_INV[0]), np.float32(_INV[1]), np.float32(_INV[2]))
    for p in pts_np:
        cx = int(np.floor((np.float32(p[0]) - xmin) * inv[0]))
        cy = int(np.floor((np.float32(p[1]) - ymin) * inv[1]))
        cz = int(np.floor((np.float32(p[2]) - zmin) * inv[2]))
        if not (0 <= cx < GX and 0 <= cy < GY and 0 <= cz < GZ):
            continue
        key = (cz * GY + cy) * GX + cx
        if key not in table:
            if len(voxels) >= MAX_VOXELS:
                continue
            table[key] = len(voxels)
            voxels.append(np.zeros((MAX_PTS, C), np.float32))
            coors.append([cz, cy, cx])
            npts.append(0)
        v = table[key]
        if npts[v] < MAX_PTS:
            voxels[v][npts[v]] = p
            npts[v] += 1
    k = len(voxels)
    vox = np.stack(voxels, 0) if k else np.zeros((0, MAX_PTS, C), np.float32)
    return vox, np.array(coors, np.int32).reshape(k, 3), np.array(npts, np.int32)


def _ref_forward(batched_pts_np):
    pillars_l, coors_l, np_l = [], [], []
    for i, pts in enumerate(batched_pts_np):
        v, cr, npp = _ref_hard_voxelize(pts)
        pillars_l.append(v)
        coors_l.append(np.concatenate(
            [np.full((cr.shape[0], 1), i, np.int32), cr], axis=1))
        np_l.append(npp)
    return (np.concatenate(pillars_l, 0), np.concatenate(coors_l, 0),
            np.concatenate(np_l, 0))


# ------------------------------ main ----------------------------------------------
if __name__ == "__main__":
    key = jax.random.PRNGKey(0)
    k1, k2 = jax.random.split(key)

    def make_pts(k, n):
        kx, kr = jax.random.split(k)
        xyz = jax.random.uniform(kx, (n, 3), jnp.float32,
                                 minval=jnp.array([-0.5, -0.5, -1.5], jnp.float32),
                                 maxval=jnp.array([7.0, 7.0, 1.5], jnp.float32))
        r = jax.random.uniform(kr, (n, 1), jnp.float32)
        return jnp.concatenate([xyz, r], axis=1)

    batched_pts = [make_pts(k1, 100), make_pts(k2, 120)]

    pillars, coors_batch, npoints = voxel_layer_forward(batched_pts)
    jax.block_until_ready((pillars, coors_batch, npoints))

    # check against pure-numpy reference of the same semantics
    ref_p, ref_c, ref_n = _ref_forward([np.asarray(p) for p in batched_pts])
    assert pillars.shape == ref_p.shape, (pillars.shape, ref_p.shape)
    np.testing.assert_array_equal(np.asarray(coors_batch), ref_c)
    np.testing.assert_array_equal(np.asarray(npoints), ref_n)
    np.testing.assert_allclose(np.asarray(pillars), ref_p, rtol=1e-6, atol=1e-6)

    print("KERNEL_OK")
</pallas_src>

<mosaic_0001>
module attributes {stable_mosaic.version = 11 : i64} {
  func.func @_assign_kernel(%arg0: memref<2x128xi32, #tpu.memory_space<smem>>, %arg1: memref<2x256xi32, #tpu.memory_space<smem>>, %arg2: memref<2x96xi32, #tpu.memory_space<smem>>, %arg3: memref<2x32xi32, #tpu.memory_space<smem>>, %arg4: memref<2xi32, #tpu.memory_space<smem>>, %arg5: memref<256xi32, #tpu.memory_space<smem>>, %arg6: memref<32xi32, #tpu.memory_space<smem>>) attributes {dimension_semantics = [], scalar_prefetch = 0 : i64, scratch_operands = 2 : i64, tpu.core_type = #tpu.core_type<tc>} {
    %c0_i32 = arith.constant 0 : i32
    %c256_i32 = arith.constant 256 : i32
    %0 = arith.addi %c0_i32, %c256_i32 : i32
    %c1_i32 = arith.constant 1 : i32
    scf.for %arg7 = %c0_i32 to %0 step %c1_i32  : i32 {
      %c-1_i32 = arith.constant -1 : i32
      %2 = arith.index_cast %arg7 : i32 to index
      %3 = memref.load %arg5[%2] : memref<256xi32, #tpu.memory_space<smem>>
      memref.store %c-1_i32, %arg5[%2] : memref<256xi32, #tpu.memory_space<smem>>
    }
    %c256_i32_0 = arith.constant 256 : i32
    %c0_i32_1 = arith.constant 0 : i32
    %c2_i32 = arith.constant 2 : i32
    %1 = arith.addi %c0_i32_1, %c2_i32 : i32
    %c1_i32_2 = arith.constant 1 : i32
    scf.for %arg7 = %c0_i32_1 to %1 step %c1_i32_2  : i32 {
      %c0_i32_4 = arith.constant 0 : i32
      %c32_i32 = arith.constant 32 : i32
      %2 = arith.addi %c0_i32_4, %c32_i32 : i32
      %c1_i32_5 = arith.constant 1 : i32
      scf.for %arg8 = %c0_i32_4 to %2 step %c1_i32_5  : i32 {
        %c0_i32_15 = arith.constant 0 : i32
        %8 = arith.index_cast %arg7 : i32 to index
        %9 = arith.index_cast %arg8 : i32 to index
        %10 = memref.load %arg3[%8, %9] : memref<2x32xi32, #tpu.memory_space<smem>>
        memref.store %c0_i32_15, %arg3[%8, %9] : memref<2x32xi32, #tpu.memory_space<smem>>
      }
      %c32_i32_6 = arith.constant 32 : i32
      %c0_i32_7 = arith.constant 0 : i32
      %c0_i32_8 = arith.constant 0 : i32
      %c128_i32 = arith.constant 128 : i32
      %3 = arith.addi %c0_i32_8, %c128_i32 : i32
      %c1_i32_9 = arith.constant 1 : i32
      %4 = scf.for %arg8 = %c0_i32_8 to %3 step %c1_i32_9 iter_args(%arg9 = %c0_i32_7) -> (i32)  : i32 {
        %8 = arith.index_cast %arg7 : i32 to index
        %9 = arith.index_cast %arg8 : i32 to index
        %10 = memref.load %arg0[%8, %9] : memref<2x128xi32, #tpu.memory_space<smem>>
        %c0_i32_15 = arith.constant 0 : i32
        %11 = arith.cmpi sge, %10, %c0_i32_15 : i32
        %c0_i32_16 = arith.constant 0 : i32
        %12 = arith.maxsi %10, %c0_i32_16 : i32
        %13 = arith.index_cast %12 : i32 to index
        %14 = memref.load %arg5[%13] : memref<256xi32, #tpu.memory_space<smem>>
        %c0_i32_17 = arith.constant 0 : i32
        %15 = arith.cmpi slt, %14, %c0_i32_17 : i32
        %16 = arith.andi %11, %15 : i1
        %c32_i32_18 = arith.constant 32 : i32
        %17 = arith.cmpi slt, %arg9, %c32_i32_18 : i32
        %18 = arith.andi %16, %17 : i1
        %19 = arith.select %18, %arg9, %14 : i32
        %20 = arith.extui %18 : i1 to i32
        %c0_i32_19 = arith.constant 0 : i32
        %21 = arith.cmpi ne, %20, %c0_i32_19 : i32
        scf.if %21 {
          %28 = arith.index_cast %10 : i32 to index
          %29 = memref.load %arg5[%28] : memref<256xi32, #tpu.memory_space<smem>>
          memref.store %arg9, %arg5[%28] : memref<256xi32, #tpu.memory_space<smem>>
          %30 = arith.index_cast %arg9 : i32 to index
          %31 = memref.load %arg6[%30] : memref<32xi32, #tpu.memory_space<smem>>
          memref.store %10, %arg6[%30] : memref<32xi32, #tpu.memory_space<smem>>
          %c8_i32 = arith.constant 8 : i32
          %32 = arith.shrsi %10, %c8_i32 : i32
          %c255_i32 = arith.constant 255 : i32
          %33 = arith.andi %10, %c255_i32 : i32
          %c4_i32 = arith.constant 4 : i32
          %34 = arith.shrsi %33, %c4_i32 : i32
          %c15_i32 = arith.constant 15 : i32
          %35 = arith.andi %33, %c15_i32 : i32
          %c3_i32 = arith.constant 3 : i32
          %36 = arith.muli %c3_i32, %arg9 : i32
          %c0_i32_23 = arith.constant 0 : i32
          %37 = arith.addi %36, %c0_i32_23 : i32
          %38 = arith.index_cast %arg7 : i32 to index
          %39 = arith.index_cast %37 : i32 to index
          %40 = memref.load %arg2[%38, %39] : memref<2x96xi32, #tpu.memory_space<smem>>
          memref.store %32, %arg2[%38, %39] : memref<2x96xi32, #tpu.memory_space<smem>>
          %c3_i32_24 = arith.constant 3 : i32
          %41 = arith.muli %c3_i32_24, %arg9 : i32
          %c1_i32_25 = arith.constant 1 : i32
          %42 = arith.addi %41, %c1_i32_25 : i32
          %43 = arith.index_cast %arg7 : i32 to index
          %44 = arith.index_cast %42 : i32 to index
          %45 = memref.load %arg2[%43, %44] : memref<2x96xi32, #tpu.memory_space<smem>>
          memref.store %34, %arg2[%43, %44] : memref<2x96xi32, #tpu.memory_space<smem>>
          %c3_i32_26 = arith.constant 3 : i32
          %46 = arith.muli %c3_i32_26, %arg9 : i32
          %c2_i32_27 = arith.constant 2 : i32
          %47 = arith.addi %46, %c2_i32_27 : i32
          %48 = arith.index_cast %arg7 : i32 to index
          %49 = arith.index_cast %47 : i32 to index
          %50 = memref.load %arg2[%48, %49] : memref<2x96xi32, #tpu.memory_space<smem>>
          memref.store %35, %arg2[%48, %49] : memref<2x96xi32, #tpu.memory_space<smem>>
        } else {
        }
        %c0_i32_20 = arith.constant 0 : i32
        %22 = arith.cmpi sge, %19, %c0_i32_20 : i32
        %23 = arith.andi %11, %22 : i1
        %24 = arith.extui %23 : i1 to i32
        %c0_i32_21 = arith.constant 0 : i32
        %25 = arith.cmpi ne, %24, %c0_i32_21 : i32
        scf.if %25 {
          %28 = arith.index_cast %arg7 : i32 to index
          %29 = arith.index_cast %19 : i32 to index
          %30 = memref.load %arg3[%28, %29] : memref<2x32xi32, #tpu.memory_space<smem>>
          %c8_i32 = arith.constant 8 : i32
          %31 = arith.cmpi slt, %30, %c8_i32 : i32
          %32 = arith.extui %31 : i1 to i32
          %c0_i32_23 = arith.constant 0 : i32
          %33 = arith.cmpi ne, %32, %c0_i32_23 : i32
          scf.if %33 {
            %c8_i32_24 = arith.constant 8 : i32
            %34 = arith.muli %19, %c8_i32_24 : i32
            %35 = arith.addi %34, %30 : i32
            %36 = arith.index_cast %arg7 : i32 to index
            %37 = arith.index_cast %35 : i32 to index
            %38 = memref.load %arg1[%36, %37] : memref<2x256xi32, #tpu.memory_space<smem>>
            memref.store %arg8, %arg1[%36, %37] : memref<2x256xi32, #tpu.memory_space<smem>>
            %c1_i32_25 = arith.constant 1 : i32
            %39 = arith.addi %30, %c1_i32_25 : i32
            %40 = arith.index_cast %arg7 : i32 to index
            %41 = arith.index_cast %19 : i32 to index
            %42 = memref.load %arg3[%40, %41] : memref<2x32xi32, #tpu.memory_space<smem>>
            memref.store %39, %arg3[%40, %41] : memref<2x32xi32, #tpu.memory_space<smem>>
          } else {
          }
        } else {
        }
        %c1_i32_22 = arith.constant 1 : i32
        %26 = arith.addi %arg9, %c1_i32_22 : i32
        %27 = arith.select %18, %26, %arg9 : i32
        scf.yield %27 : i32
      }
      %c128_i32_10 = arith.constant 128 : i32
      %5 = arith.index_cast %arg7 : i32 to index
      %6 = memref.load %arg4[%5] : memref<2xi32, #tpu.memory_space<smem>>
      memref.store %4, %arg4[%5] : memref<2xi32, #tpu.memory_space<smem>>
      %c0_i32_11 = arith.constant 0 : i32
      %c32_i32_12 = arith.constant 32 : i32
      %7 = arith.addi %c0_i32_11, %c32_i32_12 : i32
      %c1_i32_13 = arith.constant 1 : i32
      scf.for %arg8 = %c0_i32_11 to %7 step %c1_i32_13  : i32 {
        %8 = arith.cmpi slt, %arg8, %4 : i32
        %9 = arith.extui %8 : i1 to i32
        %c0_i32_15 = arith.constant 0 : i32
        %10 = arith.cmpi ne, %9, %c0_i32_15 : i32
        scf.if %10 {
          %11 = arith.index_cast %arg8 : i32 to index
          %12 = memref.load %arg6[%11] : memref<32xi32, #tpu.memory_space<smem>>
          %c-1_i32 = arith.constant -1 : i32
          %13 = arith.index_cast %12 : i32 to index
          %14 = memref.load %arg5[%13] : memref<256xi32, #tpu.memory_space<smem>>
          memref.store %c-1_i32, %arg5[%13] : memref<256xi32, #tpu.memory_space<smem>>
        } else {
        }
      }
      %c32_i32_14 = arith.constant 32 : i32
    }
    %c2_i32_3 = arith.constant 2 : i32
    return
  }
}

module attributes {stable_mosaic.version = 11 : i64} {
  func.func @_key_kernel(%arg0: i32, %arg1: memref<1x4x128xf32, #tpu.memory_space<vmem>>, %arg2: memref<1x1x128xi32, #tpu.memory_space<vmem>>) attributes {dimension_semantics = [#tpu.dimension_semantics<parallel>], iteration_bounds = array<i64: 2>, scalar_prefetch = 0 : i64, scratch_operands = 0 : i64, tpu.core_type = #tpu.core_type<tc>, window_params = [{transform_indices = @transform_0, window_bounds = array<i64: 1, 4, 128>}, {transform_indices = @transform_1, window_bounds = array<i64: 1, 1, 128>}]} {
    %c0 = arith.constant 0 : index
    %c0_0 = arith.constant 0 : index
    %c0_1 = arith.constant 0 : index
    %0 = vector.load %arg1[%c0, %c0_0, %c0_1] : memref<1x4x128xf32, #tpu.memory_space<vmem>>, vector<1x1x128xf32>
    %1 = vector.shape_cast %0 : vector<1x1x128xf32> to vector<1x128xf32>
    %c0_2 = arith.constant 0 : index
    %c1 = arith.constant 1 : index
    %c0_3 = arith.constant 0 : index
    %2 = vector.load %arg1[%c0_2, %c1, %c0_3] : memref<1x4x128xf32, #tpu.memory_space<vmem>>, vector<1x1x128xf32>
    %3 = vector.shape_cast %2 : vector<1x1x128xf32> to vector<1x128xf32>
    %c0_4 = arith.constant 0 : index
    %c2 = arith.constant 2 : index
    %c0_5 = arith.constant 0 : index
    %4 = vector.load %arg1[%c0_4, %c2, %c0_5] : memref<1x4x128xf32, #tpu.memory_space<vmem>>, vector<1x1x128xf32>
    %5 = vector.shape_cast %4 : vector<1x1x128xf32> to vector<1x128xf32>
    %cst = arith.constant 0.000000e+00 : f32
    %6 = vector.broadcast %cst : f32 to vector<1x128xf32>
    %7 = arith.subf %1, %6 : vector<1x128xf32>
    %cst_6 = arith.constant 2.500000e+00 : f32
    %8 = vector.broadcast %cst_6 : f32 to vector<1x128xf32>
    %9 = arith.mulf %7, %8 : vector<1x128xf32>
    %10 = math.floor %9 : vector<1x128xf32>
    %cst_7 = arith.constant 0.000000e+00 : f32
    %11 = vector.broadcast %cst_7 : f32 to vector<1x128xf32>
    %12 = arith.subf %3, %11 : vector<1x128xf32>
    %cst_8 = arith.constant 2.500000e+00 : f32
    %13 = vector.broadcast %cst_8 : f32 to vector<1x128xf32>
    %14 = arith.mulf %12, %13 : vector<1x128xf32>
    %15 = math.floor %14 : vector<1x128xf32>
    %cst_9 = arith.constant -1.000000e+00 : f32
    %16 = vector.broadcast %cst_9 : f32 to vector<1x128xf32>
    %17 = arith.subf %5, %16 : vector<1x128xf32>
    %cst_10 = arith.constant 5.000000e-01 : f32
    %18 = vector.broadcast %cst_10 : f32 to vector<1x128xf32>
    %19 = arith.mulf %17, %18 : vector<1x128xf32>
    %20 = math.floor %19 : vector<1x128xf32>
    %cst_11 = arith.constant 0.000000e+00 : f32
    %21 = vector.broadcast %cst_11 : f32 to vector<1x128xf32>
    %22 = arith.cmpf oge, %10, %21 : vector<1x128xf32>
    %cst_12 = arith.constant 1.600000e+01 : f32
    %23 = vector.broadcast %cst_12 : f32 to vector<1x128xf32>
    %24 = arith.cmpf olt, %10, %23 : vector<1x128xf32>
    %25 = arith.andi %22, %24 : vector<1x128xi1>
    %cst_13 = arith.constant 0.000000e+00 : f32
    %26 = vector.broadcast %cst_13 : f32 to vector<1x128xf32>
    %27 = arith.cmpf oge, %15, %26 : vector<1x128xf32>
    %28 = arith.andi %25, %27 : vector<1x128xi1>
    %cst_14 = arith.constant 1.600000e+01 : f32
    %29 = vector.broadcast %cst_14 : f32 to vector<1x128xf32>
    %30 = arith.cmpf olt, %15, %29 : vector<1x128xf32>
    %31 = arith.andi %28, %30 : vector<1x128xi1>
    %cst_15 = arith.constant 0.000000e+00 : f32
    %32 = vector.broadcast %cst_15 : f32 to vector<1x128xf32>
    %33 = arith.cmpf oge, %20, %32 : vector<1x128xf32>
    %34 = arith.andi %31, %33 : vector<1x128xi1>
    %cst_16 = arith.constant 1.000000e+00 : f32
    %35 = vector.broadcast %cst_16 : f32 to vector<1x128xf32>
    %36 = arith.cmpf olt, %20, %35 : vector<1x128xf32>
    %37 = arith.andi %34, %36 : vector<1x128xi1>
    %cst_17 = arith.constant 0.000000e+00 : f32
    %cst_18 = arith.constant 1.500000e+01 : f32
    %38 = vector.broadcast %cst_17 : f32 to vector<1x128xf32>
    %39 = arith.maximumf %38, %10 : vector<1x128xf32>
    %40 = vector.broadcast %cst_18 : f32 to vector<1x128xf32>
    %41 = arith.minimumf %40, %39 : vector<1x128xf32>
    %42 = arith.fptosi %41 : vector<1x128xf32> to vector<1x128xi32>
    %cst_19 = arith.constant 0.000000e+00 : f32
    %cst_20 = arith.constant 1.500000e+01 : f32
    %43 = vector.broadcast %cst_19 : f32 to vector<1x128xf32>
    %44 = arith.maximumf %43, %15 : vector<1x128xf32>
    %45 = vector.broadcast %cst_20 : f32 to vector<1x128xf32>
    %46 = arith.minimumf %45, %44 : vector<1x128xf32>
    %47 = arith.fptosi %46 : vector<1x128xf32> to vector<1x128xi32>
    %cst_21 = arith.constant 0.000000e+00 : f32
    %cst_22 = arith.constant 0.000000e+00 : f32
    %48 = vector.broadcast %cst_21 : f32 to vector<1x128xf32>
    %49 = arith.maximumf %48, %20 : vector<1x128xf32>
    %50 = vector.broadcast %cst_22 : f32 to vector<1x128xf32>
    %51 = arith.minimumf %50, %49 : vector<1x128xf32>
    %52 = arith.fptosi %51 : vector<1x128xf32> to vector<1x128xi32>
    %c16_i32 = arith.constant 16 : i32
    %53 = vector.broadcast %c16_i32 : i32 to vector<1x128xi32>
    %54 = arith.muli %52, %53 : vector<1x128xi32>
    %55 = arith.addi %54, %47 : vector<1x128xi32>
    %c16_i32_23 = arith.constant 16 : i32
    %56 = vector.broadcast %c16_i32_23 : i32 to vector<1x128xi32>
    %57 = arith.muli %55, %56 : vector<1x128xi32>
    %58 = arith.addi %57, %42 : vector<1x128xi32>
    %c-1_i32 = arith.constant -1 : i32
    %59 = vector.broadcast %c-1_i32 : i32 to vector<1x128xi32>
    %60 = arith.select %37, %58, %59 : vector<1x128xi1>, vector<1x128xi32>
    %c0_24 = arith.constant 0 : index
    %c0_25 = arith.constant 0 : index
    %c0_26 = arith.constant 0 : index
    %61 = vector.load %arg2[%c0_24, %c0_25, %c0_26] : memref<1x1x128xi32, #tpu.memory_space<vmem>>, vector<1x1x128xi32>
    %62 = vector.shape_cast %61 : vector<1x1x128xi32> to vector<1x128xi32>
    %63 = vector.shape_cast %60 : vector<1x128xi32> to vector<1x1x128xi32>
    tpu.vector_store %arg2[%c0_24, %c0_25, %c0_26], %63 {strides = array<i32>} : memref<1x1x128xi32, #tpu.memory_space<vmem>>, vector<1x1x128xi32>,
    return
  }
  func.func @transform_0(%arg0: i32) -> (i32, i32, i32) {
    %c0_i32 = arith.constant 0 : i32
    %c0_i32_0 = arith.constant 0 : i32
    %c0_i32_1 = arith.constant 0 : i32
    return %arg0, %c0_i32, %c0_i32_0 : i32, i32, i32
  }
  func.func @transform_1(%arg0: i32) -> (i32, i32, i32) {
    %c0_i32 = arith.constant 0 : i32
    %c0_i32_0 = arith.constant 0 : i32
    %c0_i32_1 = arith.constant 0 : i32
    return %arg0, %c0_i32, %c0_i32_0 : i32, i32, i32
  }
}

module attributes {stable_mosaic.version = 11 : i64} {
  func.func @_gather_kernel(%arg0: i32, %arg1: memref<1x4x128xf32, #tpu.memory_space<vmem>>, %arg2: memref<1x1x256xi32, #tpu.memory_space<vmem>>, %arg3: memref<1x1x256xi32, #tpu.memory_space<vmem>>, %arg4: memref<1x4x256xf32, #tpu.memory_space<vmem>>) attributes {dimension_semantics = [#tpu.dimension_semantics<parallel>], iteration_bounds = array<i64: 2>, scalar_prefetch = 0 : i64, scratch_operands = 0 : i64, tpu.core_type = #tpu.core_type<tc>, window_params = [{transform_indices = @transform_0, window_bounds = array<i64: 1, 4, 128>}, {transform_indices = @transform_1, window_bounds = array<i64: 1, 1, 256>}, {transform_indices = @transform_2, window_bounds = array<i64: 1, 1, 256>}, {transform_indices = @transform_3, window_bounds = array<i64: 1, 4, 256>}]} {
    %c0 = arith.constant 0 : index
    %c0_0 = arith.constant 0 : index
    %c0_1 = arith.constant 0 : index
    %0 = vector.load %arg1[%c0, %c0_0, %c0_1] : memref<1x4x128xf32, #tpu.memory_space<vmem>>, vector<1x4x128xf32>
    %1 = vector.shape_cast %0 : vector<1x4x128xf32> to vector<4x128xf32>
    %c0_2 = arith.constant 0 : index
    %c0_3 = arith.constant 0 : index
    %c0_4 = arith.constant 0 : index
    %2 = vector.load %arg2[%c0_2, %c0_3, %c0_4] : memref<1x1x256xi32, #tpu.memory_space<vmem>>, vector<1x1x256xi32>
    %3 = vector.shape_cast %2 : vector<1x1x256xi32> to vector<1x256xi32>
    %c0_5 = arith.constant 0 : index
    %c0_6 = arith.constant 0 : index
    %c0_7 = arith.constant 0 : index
    %4 = vector.load %arg3[%c0_5, %c0_6, %c0_7] : memref<1x1x256xi32, #tpu.memory_space<vmem>>, vector<1x1x256xi32>
    %5 = vector.shape_cast %4 : vector<1x1x256xi32> to vector<1x256xi32>
    %6 = tpu.iota {dimensions = array<i32: 1>} : vector<1x256xi32>
    %c7_i32 = arith.constant 7 : i32
    %7 = vector.broadcast %c7_i32 : i32 to vector<1x256xi32>
    %8 = arith.andi %6, %7 : vector<1x256xi32>
    %9 = arith.cmpi slt, %8, %5 : vector<1x256xi32>
    %c-1_i32 = arith.constant -1 : i32
    %10 = vector.broadcast %c-1_i32 : i32 to vector<1x256xi32>
    %11 = arith.select %9, %3, %10 : vector<1x256xi1>, vector<1x256xi32>
    %12 = tpu.iota {dimensions = array<i32: 0>} : vector<128x256xi32>
    %13 = vector.broadcast %11 : vector<1x256xi32> to vector<128x256xi32>
    %14 = arith.cmpi eq, %12, %13 : vector<128x256xi32>
    %15 = arith.extui %14 : vector<128x256xi1> to vector<128x256xi32>
    %16 = arith.sitofp %15 : vector<128x256xi32> to vector<128x256xf32>
    %cst = arith.constant dense<0.000000e+00> : vector<4x256xf32>
    %17 = tpu.matmul %1, %16, %cst {dimension_numbers = #tpu.dot_dimension_numbers<[1], [0], [0], [1], [0, 0, 1, 1], [], []>, precision = #tpu.contract_precision<fp32>} : vector<4x128xf32>, vector<128x256xf32>, vector<4x256xf32> -> vector<4x256xf32>
    %c0_8 = arith.constant 0 : index
    %c0_9 = arith.constant 0 : index
    %c0_10 = arith.constant 0 : index
    %18 = vector.load %arg4[%c0_8, %c0_9, %c0_10] : memref<1x4x256xf32, #tpu.memory_space<vmem>>, vector<1x4x256xf32>
    %19 = vector.shape_cast %18 : vector<1x4x256xf32> to vector<4x256xf32>
    %20 = vector.shape_cast %17 : vector<4x256xf32> to vector<1x4x256xf32>
    tpu.vector_store %arg4[%c0_8, %c0_9, %c0_10], %20 {strides = array<i32>} : memref<1x4x256xf32, #tpu.memory_space<vmem>>, vector<1x4x256xf32>,
    return
  }
  func.func @transform_0(%arg0: i32) -> (i32, i32, i32) {
    %c0_i32 = arith.constant 0 : i32
    %c0_i32_0 = arith.constant 0 : i32
    %c0_i32_1 = arith.constant 0 : i32
    return %arg0, %c0_i32, %c0_i32_0 : i32, i32, i32
  }
  func.func @transform_1(%arg0: i32) -> (i32, i32, i32) {
    %c0_i32 = arith.constant 0 : i32
    %c0_i32_0 = arith.constant 0 : i32
    %c0_i32_1 = arith.constant 0 : i32
    return %arg0, %c0_i32, %c0_i32_0 : i32, i32, i32
  }
  func.func @transform_2(%arg0: i32) -> (i32, i32, i32) {
    %c0_i32 = arith.constant 0 : i32
    %c0_i32_0 = arith.constant 0 : i32
    %c0_i32_1 = arith.constant 0 : i32
    return %arg0, %c0_i32, %c0_i32_0 : i32, i32, i32
  }
  func.func @transform_3(%arg0: i32) -> (i32, i32, i32) {
    %c0_i32 = arith.constant 0 : i32
    %c0_i32_0 = arith.constant 0 : i32
    %c0_i32_1 = arith.constant 0 : i32
    return %arg0, %c0_i32, %c0_i32_0 : i32, i32, i32
  }
}

</mosaic_0001>

<llo_original>
// kernel: _voxelize_batch.3
$region0: #{_voxelize_batch.3}
  #allocation0 [shape = 'u32[]', space=smem, size = 0x4, offset = 0x4, fixed_abs, tag = 'smem constant byte address 0x4 - core index']
  #allocation1 [shape = 'u32[144,128]{1,0:T(1,128)}', space=vmem, size = 0x12000, scoped, tag = 'internal scratch']
  %s0 = inlined_call_operand.hbm [shape: f32[2,4,128], index: 0, kind: input, shape index: {}]
  %s1 = inlined_call_operand.vmem [shape: s32[2,1,128], index: 1, kind: output, shape index: {}]
  %s2 = sld [smem:[#allocation0]]
  $region41: #{_voxelize_batch.3} parent=0
    _
  %s4 = ssub.s32 1, %s2
  %s5 = scalar_select 0, %s4, %s2
  $region1: #{_voxelize_batch.3} parent=0
    #allocation2 [shape = 'u8[4096]{0}', space=vmem, size = 0x1000, scoped, tag = 'input window, operand 0']
    #allocation3 [shape = 's32[2]{0}', space=sflag, size = 0x8, scoped, tag = 'scoped memory for _voxelize_batch.3']
    %6 = vsyncpa [#allocation3], 0
    %s7 = scalar_lea.sflag [#allocation3], 1
    %8 = vsyncpa %s7, 0
    loop: start=0, step=1, limit=4
    $region2: #{_voxelize_batch.3} parent=1 // loop_pre_header
      _
    $region3: #{_voxelize_batch.3} parent=1 // loop_header
      %s10 = sphi 0, %s14
      %p11 = scmp.ge.s32.totalorder %s10, 4
      %s20 = sphi 0, %s22
      %s23 = sphi 0, %s20
      %s24 = sphi 0, %s23
      %s40 = sphi 0, %s24
      %s46 = sphi 0, %s48
      %s49 = sphi 0, %s46
      %s50 = sphi 0, %s49
      %s66 = sphi 0, %s50
    $region4: #{_voxelize_batch.3} parent=1 // loop_header_branch
      %13 = sbr.rel (%p11) target = $region8
    $region5: #{_voxelize_batch.3} parent=1 // loop_body
      %s15 = ssub.s32 %s10, 1
      %s16 = ssub.s32 %s10, 2
      %s17 = sadd.s32 %s10, 1
      %s18 = ssub.s32 %s10, %s17
      %p19 = scmp.eq.s32.totalorder %s18, 0
      %s21 = sadd.s32 %s20, 1
      %s22 = scalar_select %p19, %s20, %s21
      %p25 = pneg %p19
      %p26 = scmp.eq.s32.totalorder %s10, 1
      %p27 = por %p25, %p26
      %p28 = scmp.ne.s32.totalorder %s20, %s23
      %p29 = scmp.eq.s32.totalorder %s10, 0
      %p30 = por %p28, %p29
      %p31 = scmp.ne.s32.totalorder %s20, %s23
      %p32 = scmp.eq.s32.totalorder %s15, 1
      %p33 = por %p31, %p32
      %p34 = scmp.ne.s32.totalorder %s23, %s24
      %p35 = scmp.eq.s32.totalorder %s15, 0
      %p36 = por %p34, %p35
      %p37 = scmp.ne.s32.totalorder %s23, %s24
      %p38 = scmp.eq.s32.totalorder %s16, 1
      %p39 = por %p37, %p38
      %p41 = scmp.ne.s32.totalorder %s24, %s40
      %p42 = scmp.eq.s32.totalorder %s16, 0
      %p43 = por %p41, %p42
      %s44 = ssub.s32 %s10, %s17
      %p45 = scmp.eq.s32.totalorder %s44, 0
      %s47 = sadd.s32 %s46, 1
      %s48 = scalar_select %p45, %s46, %s47
      %p51 = pneg %p45
      %p52 = scmp.eq.s32.totalorder %s10, 1
      %p53 = por %p51, %p52
      %p54 = scmp.ne.s32.totalorder %s46, %s49
      %p55 = scmp.eq.s32.totalorder %s10, 0
      %p56 = por %p54, %p55
      %p57 = scmp.ne.s32.totalorder %s46, %s49
      %p58 = scmp.eq.s32.totalorder %s15, 1
      %p59 = por %p57, %p58
      %p60 = scmp.ne.s32.totalorder %s49, %s50
      %p61 = scmp.eq.s32.totalorder %s15, 0
      %p62 = por %p60, %p61
      %p63 = scmp.ne.s32.totalorder %s49, %s50
      %p64 = scmp.eq.s32.totalorder %s16, 1
      %p65 = por %p63, %p64
      %p67 = scmp.ne.s32.totalorder %s50, %s66
      %p68 = scmp.eq.s32.totalorder %s16, 0
      %p69 = por %p67, %p68
      %p70 = scmp.le.s32.totalorder 1, %s10
      %p71 = scmp.lt.s32.totalorder %s10, 3
      %p72 = pnand %p70, %p71
      %p73 = pneg %p72
      // Predicated region
      $region9: #{_voxelize_batch.3} parent=5 // pred_check
        _
      $region10: #{_voxelize_batch.3} parent=5 // pred_check_branch
        %75 = sbr.rel (%p72) target = $region12
      $region11: #{_voxelize_batch.3} parent=5 // pred_region
        %s76 = ssub.s32 %s10, 1
      $region12: #{_voxelize_batch.3} parent=5 // pred_fallthru
        _
      %p77 = scmp.lt.s32.totalorder %s10, 2
      // Predicated region
      $region13: #{_voxelize_batch.3} parent=5 // pred_check
        %p78 = pneg %p77
      $region14: #{_voxelize_batch.3} parent=5 // pred_check_branch
        %80 = sbr.rel (%p78) target = $region16
      $region15: #{_voxelize_batch.3} parent=5 // pred_region
        // Predicated region
        $region17: #{_voxelize_batch.3} parent=15 // pred_check
          %p81 = pneg %p30
        $region18: #{_voxelize_batch.3} parent=15 // pred_check_branch
          %83 = sbr.rel (%p81) target = $region20
        $region19: #{_voxelize_batch.3} parent=15 // pred_region
          %s84 = sand.u32 %s20, 1
          %s85 = scalar_lea.sflag [#allocation3], %s84
          %s86 = sand.u32 %s20, 1
          %s87 = smul.addr %s86, 4
          %s88 = scalar_lea.vmem [#allocation2], %s87
          %s90 = ssub.s32 64, 64
          %91 = vsyncadd %s85, %s90
          %s92 = smul.addr %s10, 64
          %s93 = scalar_lea.hbm %s0, %s92
          %s95 = sshll.u32 %s88, 4
          %s96 = int_to_ptr.vmem [resolvable:$true] %s95
          %98 = dma.hbm_to_vmem [thread:$0]  %s93, 64, %s96, %s85
        $region20: #{_voxelize_batch.3} parent=15 // pred_fallthru
          _
      $region16: #{_voxelize_batch.3} parent=5 // pred_fallthru
        _
      %p99 = scmp.le.s32.totalorder 1, %s10
      %p100 = scmp.lt.s32.totalorder %s10, 3
      %p101 = pnand %p99, %p100
      %p102 = pneg %p101
      // Predicated region
      $region21: #{_voxelize_batch.3} parent=5 // pred_check
        _
      $region22: #{_voxelize_batch.3} parent=5 // pred_check_branch
        %104 = sbr.rel (%p101) target = $region24
      $region23: #{_voxelize_batch.3} parent=5 // pred_region
        %s105 = ssub.s32 %s10, 1
        %s106 = sand.u32 %s23, 1
        %s107 = scalar_lea.sflag [#allocation3], %s106
        %s108 = sand.u32 %s23, 1
        %s109 = smul.addr %s108, 4
        %s110 = scalar_lea.vmem [#allocation2], %s109
        // Predicated region
        $region25: #{_voxelize_batch.3} parent=23 // pred_check
          %p111 = pneg %p36
        $region26: #{_voxelize_batch.3} parent=23 // pred_check_branch
          %113 = sbr.rel (%p111) target = $region28
        $region27: #{_voxelize_batch.3} parent=23 // pred_region
          %114 = dma.done %s107, 64
        $region28: #{_voxelize_batch.3} parent=23 // pred_fallthru
          _
        %s115 = sand.u32 %s23, 1
        %s116 = scalar_lea.sflag [#allocation3], %s115
        %s117 = sand.u32 %s23, 1
        %s118 = smul.addr %s117, 4
        %s119 = scalar_lea.vmem [#allocation2], %s118
        %p120 = pneg %p36
        %p121 = pneg %p33
        %p122 = pneg %p62
        %p123 = pneg %p59
        %p124 = scmp.lt.s32.totalorder %s15, 1
        %s125 = scalar_select %p124, %s15, 1
        %s126 = scalar_lea.vmem %s1, %s125
        %p127 = scmp.lt.s32.totalorder %s15, 1
        %s128 = scalar_select %p127, %s15, 1
        %s129 = scalar_lea.vmem %s1, %s128
        %v130 = vld [vmem:[%s110] sm:$0x1]
        %v131 = vld [vmem:[%s110 + $0x1] sm:$0x1]
        %v132 = vld [vmem:[%s110 + $0x2] sm:$0x1]
        %v133 = vmul.f32 %v130, 2.5
        %v134 = vfloor.f32 %v133
        %v135 = vmul.f32 %v131, 2.5
        %v136 = vfloor.f32 %v135
        %v137 = vsub.f32 %v132, -1.0
        %v138 = vmul.f32 %v137, 0.5
        %v139 = vfloor.f32 %v138
        %vm140 = vcmp.ge.f32.partialorder %v134, 0.0
        %vm141 = vcmp.lt.f32.partialorder %v134, 16.0
        %vm142 = vmand %vm140, %vm141
        %vm143 = vcmp.ge.f32.partialorder %v136, 0.0
        %vm144 = vmand %vm142, %vm143
        %vm145 = vcmp.lt.f32.partialorder %v136, 16.0
        %vm146 = vmand %vm144, %vm145
        %vm147 = vcmp.ge.f32.partialorder %v139, 0.0
        %vm148 = vmand %vm146, %vm147
        %vm149 = vcmp.lt.f32.partialorder %v139, 1.0
        %vm150 = vmand %vm148, %vm149
        %v151 = vmax.f32 %v134, 0.0
        %v152 = vmin.f32 %v151, 15.0
        %v153 = vcvt.f32.s32.to.zero.pseudo %v152
        %v154 = vmax.f32 %v136, 0.0
        %v155 = vmin.f32 %v154, 15.0
        %v156 = vcvt.f32.s32.to.zero.pseudo %v155
        %v157 = vmax.f32 %v139, 0.0
        %v158 = vmin.f32 %v157, 0.0
        %v159 = vcvt.f32.s32.to.zero.pseudo %v158
        %v160 = vmul.u32 %v159, 16
        %v161 = vadd.s32 %v160, %v156
        %v162 = vmul.u32 %v161, 16
        %v163 = vadd.s32 %v162, %v153
        %v164 = vsel %vm150, %v163, 4294967295
        %165 = vst [vmem:[%s129] sm:$0x1] %v164
        %p166 = scmp.lt.s32.totalorder %s15, 1
        %s167 = scalar_select %p166, %s15, 1
        %s168 = scalar_lea.vmem %s1, %s167
        // Predicated region
        $region29: #{_voxelize_batch.3} parent=23 // pred_check
          %p169 = pneg %p59
        $region30: #{_voxelize_batch.3} parent=23 // pred_check_branch
          %171 = sbr.rel (%p169) target = $region32
        $region31: #{_voxelize_batch.3} parent=23 // pred_region
          _
        $region32: #{_voxelize_batch.3} parent=23 // pred_fallthru
          _
      $region24: #{_voxelize_batch.3} parent=5 // pred_fallthru
        _
      %p172 = scmp.le.s32.totalorder 2, %s10
      // Predicated region
      $region33: #{_voxelize_batch.3} parent=5 // pred_check
        %p173 = pneg %p172
      $region34: #{_voxelize_batch.3} parent=5 // pred_check_branch
        %175 = sbr.rel (%p173) target = $region36
      $region35: #{_voxelize_batch.3} parent=5 // pred_region
        %s176 = ssub.s32 %s10, 2
        // Predicated region
        $region37: #{_voxelize_batch.3} parent=35 // pred_check
          %p177 = pneg %p65
        $region38: #{_voxelize_batch.3} parent=35 // pred_check_branch
          %179 = sbr.rel (%p177) target = $region40
        $region39: #{_voxelize_batch.3} parent=35 // pred_region
          %p180 = scmp.lt.s32.totalorder %s16, 1
          %s181 = scalar_select %p180, %s16, 1
          %s182 = scalar_lea.vmem %s1, %s181
        $region40: #{_voxelize_batch.3} parent=35 // pred_fallthru
          _
      $region36: #{_voxelize_batch.3} parent=5 // pred_fallthru
        _
    $region6: #{_voxelize_batch.3} parent=1 // loop_footer
      %s14 = sadd.s32 1, %s10
    $region7: #{_voxelize_batch.3} parent=1 // loop_footer_branch
      %9 = sbr.rel target = $region3
    $region8: #{_voxelize_batch.3} parent=1 // loop_exit
      _
    %183 = vsyncpa [#allocation3], 1
    %s184 = scalar_lea.sflag [#allocation3], 1
    %185 = vsyncpa %s184, 1

// kernel: _voxelize_batch.4
$region0: #{_voxelize_batch.4}
  #allocation0 [shape = 'u32[]', space=smem, size = 0x4, offset = 0x4, fixed_abs, tag = 'smem constant byte address 0x4 - core index']
  #allocation1 [shape = 'u32[144,128]{1,0:T(1,128)}', space=vmem, size = 0x12000, scoped, tag = 'internal scratch']
  #allocation2 [shape = 's32[256]{0:T(128)}', space=smem, size = 0x400, scoped, tag = 'scratch operand']
  #allocation3 [shape = 's32[32]{0:T(128)}', space=smem, size = 0x200, scoped, tag = 'scratch operand']
  %s0 = inlined_call_operand.vmem [shape: s32[2,128], index: 0, kind: input, shape index: {}]
  %s1 = inlined_call_operand.vmem [shape: s32[2,256], index: 1, kind: output, shape index: {0}]
  %s2 = inlined_call_operand.vmem [shape: s32[2,96], index: 2, kind: output, shape index: {1}]
  %s3 = inlined_call_operand.vmem [shape: s32[2,32], index: 3, kind: output, shape index: {2}]
  %s4 = inlined_call_operand.hbm [shape: s32[2], index: 4, kind: output, shape index: {3}]
  %5 = xla_tuple %s1, %s2, %s3, %s4
  %s6 = sld [smem:[#allocation0]]
  $region93: #{_voxelize_batch.4} parent=0
    _
  %s8 = ssub.s32 1, %s6
  %s9 = scalar_select 0, %s8, %s6
  $region1: #{_voxelize_batch.4} parent=0
    #allocation4 [shape = 'u8[1024]{0}', space=smem, size = 0x400, scoped, tag = 'input window, operand 0, single buffered']
    #allocation5 [shape = 's32[1]{0}', space=sflag, size = 0x4, scoped, tag = 'scoped memory for _voxelize_batch.4']
    #allocation6 [shape = 's32[1]{0}', space=sflag, size = 0x4, scoped, tag = 'scoped memory for _voxelize_batch.4']
    #allocation7 [shape = 's32[1]{0}', space=sflag, size = 0x4, scoped, tag = 'scoped memory for _voxelize_batch.4']
    #allocation8 [shape = 'u8[2048]{0}', space=smem, size = 0x800, scoped, tag = 'output window, operand 0, single buffered']
    #allocation9 [shape = 'u8[1024]{0}', space=smem, size = 0x400, scoped, tag = 'output window, operand 1, single buffered']
    #allocation10 [shape = 's32[1]{0}', space=sflag, size = 0x4, scoped, tag = 'scoped memory for _voxelize_batch.4']
    #allocation11 [shape = 'u8[1024]{0}', space=smem, size = 0x400, scoped, tag = 'output window, operand 2, single buffered']
    #allocation12 [shape = 'u8[512]{0}', space=smem, size = 0x200, scoped, tag = 'output window, operand 3, single buffered']
    %10 = vsyncpa [#allocation6], 0
    %11 = vsyncpa [#allocation7], 0
    %12 = vsyncpa [#allocation10], 0
    %13 = vsyncpa [#allocation5], 0
    // Predicated region
    $region2: #{_voxelize_batch.4} parent=1 // pred_check
      _
    $region3: #{_voxelize_batch.4} parent=1 // pred_check_branch
      %15 = sbr.rel (0) target = $region5
    $region4: #{_voxelize_batch.4} parent=1 // pred_region
      %s17 = ssub.s32 32, 32
      %18 = vsyncadd [#allocation6], %s17
      %s20 = sshll.u32 %s0, 4
      %s21 = int_to_ptr.vmem [resolvable:$true] %s20
      %23 = dma.vmem_to_smem %s21, 32, [#allocation4], [#allocation6]
    $region5: #{_voxelize_batch.4} parent=1 // pred_fallthru
      _
    // Predicated region
    $region6: #{_voxelize_batch.4} parent=1 // pred_check
      _
    $region7: #{_voxelize_batch.4} parent=1 // pred_check_branch
      %25 = sbr.rel (0) target = $region9
    $region8: #{_voxelize_batch.4} parent=1 // pred_region
      %26 = dma.done [#allocation6], 32
    $region9: #{_voxelize_batch.4} parent=1 // pred_fallthru
      _
    %27 = sfence
    loop: start=0, step=1, limit=256
    $region10: #{_voxelize_batch.4} parent=1 // loop_pre_header
      _
    $region11: #{_voxelize_batch.4} parent=1 // loop_header
      %s29 = sphi 0, %s33
      %p30 = scmp.ge.s32.totalorder %s29, 256
    $region12: #{_voxelize_batch.4} parent=1 // loop_header_branch
      %32 = sbr.rel (%p30) target = $region16
    $region13: #{_voxelize_batch.4} parent=1 // loop_body
      %s34 = scalar_lea.smem [#allocation2], %s29
      %35 = sst [smem:[%s34]] 4294967295
    $region14: #{_voxelize_batch.4} parent=1 // loop_footer
      %s33 = sadd.s32 1, %s29
    $region15: #{_voxelize_batch.4} parent=1 // loop_footer_branch
      %28 = sbr.rel target = $region11
    $region16: #{_voxelize_batch.4} parent=1 // loop_exit
      _
    loop: start=0, step=1, limit=2
    $region17: #{_voxelize_batch.4} parent=1 // loop_pre_header
      _
    $region18: #{_voxelize_batch.4} parent=1 // loop_header
      %s37 = sphi 0, %s41
      %p38 = scmp.ge.s32.totalorder %s37, 2
    $region19: #{_voxelize_batch.4} parent=1 // loop_header_branch
      %40 = sbr.rel (%p38) target = $region23
    $region20: #{_voxelize_batch.4} parent=1 // loop_body
      loop: start=0, step=1, limit=32
      $region24: #{_voxelize_batch.4} parent=20 // loop_pre_header
        _
      $region25: #{_voxelize_batch.4} parent=20 // loop_header
        %s43 = sphi 0, %s47
        %p44 = scmp.ge.s32.totalorder %s43, 32
      $region26: #{_voxelize_batch.4} parent=20 // loop_header_branch
        %46 = sbr.rel (%p44) target = $region30
      $region27: #{_voxelize_batch.4} parent=20 // loop_body
        %s48 = sshra.s32 %s43, 7
        %s49 = sand.u32 %s43, 127
        %s50 = sadd.s32 %s48, %s37
        %s51 = smul.u32 %s50, 128
        %s52 = sshra.s32 %s43, 7
        %s53 = sand.u32 %s43, 127
        %s54 = sadd.s32 %s51, %s53
        %s55 = scalar_lea.smem [#allocation11], %s54
        %56 = sst [smem:[%s55]] 0
      $region28: #{_voxelize_batch.4} parent=20 // loop_footer
        %s47 = sadd.s32 1, %s43
      $region29: #{_voxelize_batch.4} parent=20 // loop_footer_branch
        %42 = sbr.rel target = $region25
      $region30: #{_voxelize_batch.4} parent=20 // loop_exit
        _
      loop: start=0, step=1, limit=128
      $region31: #{_voxelize_batch.4} parent=20 // loop_pre_header
        _
      $region32: #{_voxelize_batch.4} parent=20 // loop_header
        %s58 = sphi 0, %s62
        %p59 = scmp.ge.s32.totalorder %s58, 128
        %s63 = sphi 0, %s162
      $region33: #{_voxelize_batch.4} parent=20 // loop_header_branch
        %61 = sbr.rel (%p59) target = $region37
      $region34: #{_voxelize_batch.4} parent=20 // loop_body
        %s64 = sshra.s32 %s58, 7
        %s65 = sand.u32 %s58, 127
        %s66 = sadd.s32 %s64, %s37
        %s67 = smul.u32 %s66, 128
        %s68 = sshra.s32 %s58, 7
        %s69 = sand.u32 %s58, 127
        %s70 = sadd.s32 %s67, %s69
        %s71 = sld [smem:[#allocation4 + %s70]]
        %p72 = scmp.ge.s32.totalorder %s71, 0
        %p73 = scmp.gt.s32.totalorder %s71, 0
        %s74 = scalar_select %p73, %s71, 0
        %s75 = sld [smem:[#allocation2 + %s74]]
        %p76 = scmp.lt.s32.totalorder %s75, 0
        %p77 = pnand %p72, %p76
        %p78 = pneg %p77
        %p79 = scmp.lt.s32.totalorder %s63, 32
        %p80 = pnand %p78, %p79
        %p81 = pneg %p80
        %s82 = scalar_select %p81, %s63, %s75
        // Predicated region
        $region38: #{_voxelize_batch.4} parent=34 // pred_check
          _
        $region39: #{_voxelize_batch.4} parent=34 // pred_check_branch
          %84 = sbr.rel (%p80) target = $region41
        $region40: #{_voxelize_batch.4} parent=34 // pred_region
          %s85 = scalar_lea.smem [#allocation2], %s71
          %86 = sst [smem:[%s85]] %s63
          %s87 = scalar_lea.smem [#allocation3], %s63
          %88 = sst [smem:[%s87]] %s71
          %s89 = sshra.s32 %s71, 8
          %s90 = sand.u32 %s71, 255
          %s91 = sshra.s32 %s90, 4
          %s92 = sand.u32 %s90, 15
          %s93 = smul.u32 %s63, 3
          %s94 = sshra.s32 %s93, 7
          %s95 = sand.u32 %s93, 127
          %s96 = sadd.s32 %s94, %s37
          %s97 = smul.u32 %s96, 128
          %s98 = sshra.s32 %s93, 7
          %s99 = sand.u32 %s93, 127
          %s100 = sadd.s32 %s97, %s99
          %s101 = scalar_lea.smem [#allocation9], %s100
          %102 = sst [smem:[%s101]] %s89
          %s103 = sadd.s32 %s93, 1
          %s104 = sshra.s32 %s103, 7
          %s105 = sand.u32 %s103, 127
          %s106 = sadd.s32 %s104, %s37
          %s107 = smul.u32 %s106, 128
          %s108 = sshra.s32 %s103, 7
          %s109 = sand.u32 %s103, 127
          %s110 = sadd.s32 %s107, %s109
          %s111 = scalar_lea.smem [#allocation9], %s110
          %112 = sst [smem:[%s111]] %s91
          %s113 = sadd.s32 %s93, 2
          %s114 = sshra.s32 %s113, 7
          %s115 = sand.u32 %s113, 127
          %s116 = sadd.s32 %s114, %s37
          %s117 = smul.u32 %s116, 128
          %s118 = sshra.s32 %s113, 7
          %s119 = sand.u32 %s113, 127
          %s120 = sadd.s32 %s117, %s119
          %s121 = scalar_lea.smem [#allocation9], %s120
          %122 = sst [smem:[%s121]] %s92
        $region41: #{_voxelize_batch.4} parent=34 // pred_fallthru
          _
        %p123 = scmp.ge.s32.totalorder %s82, 0
        %p124 = pnand %p72, %p123
        %p125 = pneg %p124
        // Predicated region
        $region42: #{_voxelize_batch.4} parent=34 // pred_check
          _
        $region43: #{_voxelize_batch.4} parent=34 // pred_check_branch
          %127 = sbr.rel (%p124) target = $region45
        $region44: #{_voxelize_batch.4} parent=34 // pred_region
          %s128 = sshra.s32 %s82, 7
          %s129 = sand.u32 %s82, 127
          %s130 = sadd.s32 %s128, %s37
          %s131 = smul.u32 %s130, 128
          %s132 = sshra.s32 %s82, 7
          %s133 = sand.u32 %s82, 127
          %s134 = sadd.s32 %s131, %s133
          %s135 = sld [smem:[#allocation11 + %s134]]
          %p136 = scmp.lt.s32.totalorder %s135, 8
          // Predicated region
          $region46: #{_voxelize_batch.4} parent=44 // pred_check
            %p137 = pneg %p136
          $region47: #{_voxelize_batch.4} parent=44 // pred_check_branch
            %139 = sbr.rel (%p137) target = $region49
          $region48: #{_voxelize_batch.4} parent=44 // pred_region
            %s140 = smul.u32 %s82, 8
            %s141 = sadd.s32 %s140, %s135
            %s142 = sshra.s32 %s141, 7
            %s143 = sand.u32 %s141, 127
            %s144 = sshra.s32 %s37, 1
            %s145 = sand.u32 %s37, 1
            %s146 = smul.u32 %s144, 2
            %s147 = sadd.s32 %s142, %s146
            %s148 = smul.u32 %s147, 256
            %s149 = sshra.s32 %s37, 1
            %s150 = sand.u32 %s37, 1
            %s151 = sshra.s32 %s141, 7
            %s152 = sand.u32 %s141, 127
            %s153 = smul.u32 %s150, 128
            %s154 = sadd.s32 %s153, %s152
            %s155 = sadd.s32 %s148, %s154
            %s156 = scalar_lea.smem [#allocation8], %s155
            %157 = sst [smem:[%s156]] %s58
            %s158 = sadd.s32 %s135, 1
            %s159 = scalar_lea.smem [#allocation11], %s134
            %160 = sst [smem:[%s159]] %s158
          $region49: #{_voxelize_batch.4} parent=44 // pred_fallthru
            _
        $region45: #{_voxelize_batch.4} parent=34 // pred_fallthru
          _
        %s161 = sadd.s32 %s63, 1
        %s162 = scalar_select %p81, %s161, %s63
      $region35: #{_voxelize_batch.4} parent=20 // loop_footer
        %s62 = sadd.s32 1, %s58
      $region36: #{_voxelize_batch.4} parent=20 // loop_footer_branch
        %57 = sbr.rel target = $region32
      $region37: #{_voxelize_batch.4} parent=20 // loop_exit
        _
      %s163 = scalar_lea.smem [#allocation12], %s37
      %164 = sst [smem:[%s163]] %s63
      loop: start=0, step=1, limit=32
      $region50: #{_voxelize_batch.4} parent=20 // loop_pre_header
        _
      $region51: #{_voxelize_batch.4} parent=20 // loop_header
        %s166 = sphi 0, %s170
        %p167 = scmp.ge.s32.totalorder %s166, 32
      $region52: #{_voxelize_batch.4} parent=20 // loop_header_branch
        %169 = sbr.rel (%p167) target = $region56
      $region53: #{_voxelize_batch.4} parent=20 // loop_body
        %p171 = scmp.lt.s32.totalorder %s166, %s63
        // Predicated region
        $region57: #{_voxelize_batch.4} parent=53 // pred_check
          %p172 = pneg %p171
        $region58: #{_voxelize_batch.4} parent=53 // pred_check_branch
          %174 = sbr.rel (%p172) target = $region60
        $region59: #{_voxelize_batch.4} parent=53 // pred_region
          %s175 = sld [smem:[#allocation3 + %s166]]
          %s176 = scalar_lea.smem [#allocation2], %s175
          %177 = sst [smem:[%s176]] 4294967295
        $region60: #{_voxelize_batch.4} parent=53 // pred_fallthru
          _
      $region54: #{_voxelize_batch.4} parent=20 // loop_footer
        %s170 = sadd.s32 1, %s166
      $region55: #{_voxelize_batch.4} parent=20 // loop_footer_branch
        %165 = sbr.rel target = $region51
      $region56: #{_voxelize_batch.4} parent=20 // loop_exit
        _
    $region21: #{_voxelize_batch.4} parent=1 // loop_footer
      %s41 = sadd.s32 1, %s37
    $region22: #{_voxelize_batch.4} parent=1 // loop_footer_branch
      %36 = sbr.rel target = $region18
    $region23: #{_voxelize_batch.4} parent=1 // loop_exit
      _
    // Predicated region
    $region61: #{_voxelize_batch.4} parent=1 // pred_check
      _
    $region62: #{_voxelize_batch.4} parent=1 // pred_check_branch
      %179 = sbr.rel (0) target = $region64
    $region63: #{_voxelize_batch.4} parent=1 // pred_region
      %s181 = ssub.s32 64, 64
      %182 = vsyncadd [#allocation7], %s181
      %s184 = sshll.u32 %s1, 4
      %s185 = int_to_ptr.vmem [resolvable:$true] %s184
      %187 = dma.smem_to_vmem [#allocation8], 64, %s185, [#allocation7]
    $region64: #{_voxelize_batch.4} parent=1 // pred_fallthru
      _
    // Predicated region
    $region65: #{_voxelize_batch.4} parent=1 // pred_check
      _
    $region66: #{_voxelize_batch.4} parent=1 // pred_check_branch
      %189 = sbr.rel (0) target = $region68
    $region67: #{_voxelize_batch.4} parent=1 // pred_region
      %s191 = ssub.s32 32, 32
      %192 = vsyncadd [#allocation10], %s191
      %s194 = sshll.u32 %s2, 4
      %s195 = int_to_ptr.vmem [resolvable:$true] %s194
      %197 = dma.smem_to_vmem [#allocation9], 32, %s195, [#allocation10]
    $region68: #{_voxelize_batch.4} parent=1 // pred_fallthru
      _
    // Predicated region
    $region69: #{_voxelize_batch.4} parent=1 // pred_check
      _
    $region70: #{_voxelize_batch.4} parent=1 // pred_check_branch
      %199 = sbr.rel (0) target = $region72
    $region71: #{_voxelize_batch.4} parent=1 // pred_region
      %s201 = ssub.s32 32, 32
      %202 = vsyncadd [#allocation10], %s201
      %s204 = sshll.u32 %s3, 4
      %s205 = int_to_ptr.vmem [resolvable:$true] %s204
      %207 = dma.smem_to_vmem [#allocation11], 32, %s205, [#allocation10]
    $region72: #{_voxelize_batch.4} parent=1 // pred_fallthru
      _
    // Predicated region
    $region73: #{_voxelize_batch.4} parent=1 // pred_check
      _
    $region74: #{_voxelize_batch.4} parent=1 // pred_check_branch
      %209 = sbr.rel (0) target = $region76
    $region75: #{_voxelize_batch.4} parent=1 // pred_region
      %s211 = ssub.s32 16, 16
      %212 = vsyncadd [#allocation5], %s211
      %215 = dma.smem_to_hbm [#allocation12], 16, %s4, [#allocation5]
    $region76: #{_voxelize_batch.4} parent=1 // pred_fallthru
      _
    // Predicated region
    $region77: #{_voxelize_batch.4} parent=1 // pred_check
      _
    $region78: #{_voxelize_batch.4} parent=1 // pred_check_branch
      %217 = sbr.rel (0) target = $region80
    $region79: #{_voxelize_batch.4} parent=1 // pred_region
      %218 = dma.done [#allocation7], 64
    $region80: #{_voxelize_batch.4} parent=1 // pred_fallthru
      _
    // Predicated region
    $region81: #{_voxelize_batch.4} parent=1 // pred_check
      _
    $region82: #{_voxelize_batch.4} parent=1 // pred_check_branch
      %220 = sbr.rel (0) target = $region84
    $region83: #{_voxelize_batch.4} parent=1 // pred_region
      %221 = dma.done [#allocation10], 32
    $region84: #{_voxelize_batch.4} parent=1 // pred_fallthru
      _
    // Predicated region
    $region85: #{_voxelize_batch.4} parent=1 // pred_check
      _
    $region86: #{_voxelize_batch.4} parent=1 // pred_check_branch
      %223 = sbr.rel (0) target = $region88
    $region87: #{_voxelize_batch.4} parent=1 // pred_region
      %224 = dma.done [#allocation10], 32
    $region88: #{_voxelize_batch.4} parent=1 // pred_fallthru
      _
    // Predicated region
    $region89: #{_voxelize_batch.4} parent=1 // pred_check
      _
    $region90: #{_voxelize_batch.4} parent=1 // pred_check_branch
      %226 = sbr.rel (0) target = $region92
    $region91: #{_voxelize_batch.4} parent=1 // pred_region
      %227 = dma.done [#allocation5], 16
    $region92: #{_voxelize_batch.4} parent=1 // pred_fallthru
      _
    %228 = sfence
    %229 = vsyncpa [#allocation5], 1
    %230 = vsyncpa [#allocation6], 1
    %231 = vsyncpa [#allocation7], 1
    %232 = vsyncpa [#allocation10], 1

// kernel: _voxelize_batch.5
$region0: #{_voxelize_batch.5}
  #allocation0 [shape = 'u32[]', space=smem, size = 0x4, offset = 0x4, fixed_abs, tag = 'smem constant byte address 0x4 - core index']
  #allocation1 [shape = 'u32[144,128]{1,0:T(1,128)}', space=vmem, size = 0x12000, scoped, tag = 'internal scratch']
  %s0 = inlined_call_operand.vmem [shape: f32[2,4,128], index: 0, kind: input, shape index: {}]
  %s1 = inlined_call_operand.vmem [shape: s32[2,1,256], index: 1, kind: input, shape index: {}]
  %s2 = inlined_call_operand.vmem [shape: s32[2,1,256], index: 2, kind: input, shape index: {}]
  %s3 = inlined_call_operand.vmem [shape: f32[2,4,256], index: 3, kind: output, shape index: {}]
  %s4 = sld [smem:[#allocation0]]
  $region45: #{_voxelize_batch.5} parent=0
    _
  %s6 = ssub.s32 1, %s4
  %s7 = scalar_select 0, %s6, %s4
  loop: start=0, step=1, limit=4
  $region2: #{_voxelize_batch.5} parent=0 // loop_pre_header
    _
  $region3: #{_voxelize_batch.5} parent=0 // loop_header
    %s9 = sphi 0, %s13
    %p10 = scmp.ge.s32.totalorder %s9, 4
    %s19 = sphi 0, %s21
    %s22 = sphi 0, %s19
    %s23 = sphi 0, %s22
    %s39 = sphi 0, %s23
    %s45 = sphi 0, %s47
    %s48 = sphi 0, %s45
    %s49 = sphi 0, %s48
    %s65 = sphi 0, %s49
    %s71 = sphi 0, %s73
    %s74 = sphi 0, %s71
    %s75 = sphi 0, %s74
    %s91 = sphi 0, %s75
    %s97 = sphi 0, %s99
    %s100 = sphi 0, %s97
    %s101 = sphi 0, %s100
    %s117 = sphi 0, %s101
  $region4: #{_voxelize_batch.5} parent=0 // loop_header_branch
    %12 = sbr.rel (%p10) target = $region8
  $region5: #{_voxelize_batch.5} parent=0 // loop_body
    %s14 = ssub.s32 %s9, 1
    %s15 = ssub.s32 %s9, 2
    %s16 = sadd.s32 %s9, 1
    %s17 = ssub.s32 %s9, %s16
    %p18 = scmp.eq.s32.totalorder %s17, 0
    %s20 = sadd.s32 %s19, 1
    %s21 = scalar_select %p18, %s19, %s20
    %p24 = pneg %p18
    %p25 = scmp.eq.s32.totalorder %s9, 1
    %p26 = por %p24, %p25
    %p27 = scmp.ne.s32.totalorder %s19, %s22
    %p28 = scmp.eq.s32.totalorder %s9, 0
    %p29 = por %p27, %p28
    %p30 = scmp.ne.s32.totalorder %s19, %s22
    %p31 = scmp.eq.s32.totalorder %s14, 1
    %p32 = por %p30, %p31
    %p33 = scmp.ne.s32.totalorder %s22, %s23
    %p34 = scmp.eq.s32.totalorder %s14, 0
    %p35 = por %p33, %p34
    %p36 = scmp.ne.s32.totalorder %s22, %s23
    %p37 = scmp.eq.s32.totalorder %s15, 1
    %p38 = por %p36, %p37
    %p40 = scmp.ne.s32.totalorder %s23, %s39
    %p41 = scmp.eq.s32.totalorder %s15, 0
    %p42 = por %p40, %p41
    %s43 = ssub.s32 %s9, %s16
    %p44 = scmp.eq.s32.totalorder %s43, 0
    %s46 = sadd.s32 %s45, 1
    %s47 = scalar_select %p44, %s45, %s46
    %p50 = pneg %p44
    %p51 = scmp.eq.s32.totalorder %s9, 1
    %p52 = por %p50, %p51
    %p53 = scmp.ne.s32.totalorder %s45, %s48
    %p54 = scmp.eq.s32.totalorder %s9, 0
    %p55 = por %p53, %p54
    %p56 = scmp.ne.s32.totalorder %s45, %s48
    %p57 = scmp.eq.s32.totalorder %s14, 1
    %p58 = por %p56, %p57
    %p59 = scmp.ne.s32.totalorder %s48, %s49
    %p60 = scmp.eq.s32.totalorder %s14, 0
    %p61 = por %p59, %p60
    %p62 = scmp.ne.s32.totalorder %s48, %s49
    %p63 = scmp.eq.s32.totalorder %s15, 1
    %p64 = por %p62, %p63
    %p66 = scmp.ne.s32.totalorder %s49, %s65
    %p67 = scmp.eq.s32.totalorder %s15, 0
    %p68 = por %p66, %p67
    %s69 = ssub.s32 %s9, %s16
    %p70 = scmp.eq.s32.totalorder %s69, 0
    %s72 = sadd.s32 %s71, 1
    %s73 = scalar_select %p70, %s71, %s72
    %p76 = pneg %p70
    %p77 = scmp.eq.s32.totalorder %s9, 1
    %p78 = por %p76, %p77
    %p79 = scmp.ne.s32.totalorder %s71, %s74
    %p80 = scmp.eq.s32.totalorder %s9, 0
    %p81 = por %p79, %p80
    %p82 = scmp.ne.s32.totalorder %s71, %s74
    %p83 = scmp.eq.s32.totalorder %s14, 1
    %p84 = por %p82, %p83
    %p85 = scmp.ne.s32.totalorder %s74, %s75
    %p86 = scmp.eq.s32.totalorder %s14, 0
    %p87 = por %p85, %p86
    %p88 = scmp.ne.s32.totalorder %s74, %s75
    %p89 = scmp.eq.s32.totalorder %s15, 1
    %p90 = por %p88, %p89
    %p92 = scmp.ne.s32.totalorder %s75, %s91
    %p93 = scmp.eq.s32.totalorder %s15, 0
    %p94 = por %p92, %p93
    %s95 = ssub.s32 %s9, %s16
    %p96 = scmp.eq.s32.totalorder %s95, 0
    %s98 = sadd.s32 %s97, 1
    %s99 = scalar_select %p96, %s97, %s98
    %p102 = pneg %p96
    %p103 = scmp.eq.s32.totalorder %s9, 1
    %p104 = por %p102, %p103
    %p105 = scmp.ne.s32.totalorder %s97, %s100
    %p106 = scmp.eq.s32.totalorder %s9, 0
    %p107 = por %p105, %p106
    %p108 = scmp.ne.s32.totalorder %s97, %s100
    %p109 = scmp.eq.s32.totalorder %s14, 1
    %p110 = por %p108, %p109
    %p111 = scmp.ne.s32.totalorder %s100, %s101
    %p112 = scmp.eq.s32.totalorder %s14, 0
    %p113 = por %p111, %p112
    %p114 = scmp.ne.s32.totalorder %s100, %s101
    %p115 = scmp.eq.s32.totalorder %s15, 1
    %p116 = por %p114, %p115
    %p118 = scmp.ne.s32.totalorder %s101, %s117
    %p119 = scmp.eq.s32.totalorder %s15, 0
    %p120 = por %p118, %p119
    %p121 = scmp.le.s32.totalorder 1, %s9
    %p122 = scmp.lt.s32.totalorder %s9, 3
    %p123 = pnand %p121, %p122
    %p124 = pneg %p123
    // Predicated region
    $region9: #{_voxelize_batch.5} parent=5 // pred_check
      _
    $region10: #{_voxelize_batch.5} parent=5 // pred_check_branch
      %126 = sbr.rel (%p123) target = $region12
    $region11: #{_voxelize_batch.5} parent=5 // pred_region
      %s127 = ssub.s32 %s9, 1
    $region12: #{_voxelize_batch.5} parent=5 // pred_fallthru
      _
    %p128 = scmp.lt.s32.totalorder %s9, 2
    // Predicated region
    $region13: #{_voxelize_batch.5} parent=5 // pred_check
      %p129 = pneg %p128
    $region14: #{_voxelize_batch.5} parent=5 // pred_check_branch
      %131 = sbr.rel (%p129) target = $region16
    $region15: #{_voxelize_batch.5} parent=5 // pred_region
      // Predicated region
      $region17: #{_voxelize_batch.5} parent=15 // pred_check
        %p132 = pneg %p29
      $region18: #{_voxelize_batch.5} parent=15 // pred_check_branch
        %134 = sbr.rel (%p132) target = $region20
      $region19: #{_voxelize_batch.5} parent=15 // pred_region
        %p135 = scmp.lt.s32.totalorder %s9, 1
        %s136 = scalar_select %p135, %s9, 1
        %s137 = smul.addr %s136, 4
        %s138 = scalar_lea.vmem %s0, %s137
      $region20: #{_voxelize_batch.5} parent=15 // pred_fallthru
        _
      // Predicated region
      $region21: #{_voxelize_batch.5} parent=15 // pred_check
        %p139 = pneg %p55
      $region22: #{_voxelize_batch.5} parent=15 // pred_check_branch
        %141 = sbr.rel (%p139) target = $region24
      $region23: #{_voxelize_batch.5} parent=15 // pred_region
        %p142 = scmp.lt.s32.totalorder %s9, 1
        %s143 = scalar_select %p142, %s9, 1
        %s144 = smul.addr %s143, 2
        %s145 = scalar_lea.vmem %s1, %s144
      $region24: #{_voxelize_batch.5} parent=15 // pred_fallthru
        _
      // Predicated region
      $region25: #{_voxelize_batch.5} parent=15 // pred_check
        %p146 = pneg %p81
      $region26: #{_voxelize_batch.5} parent=15 // pred_check_branch
        %148 = sbr.rel (%p146) target = $region28
      $region27: #{_voxelize_batch.5} parent=15 // pred_region
        %p149 = scmp.lt.s32.totalorder %s9, 1
        %s150 = scalar_select %p149, %s9, 1
        %s151 = smul.addr %s150, 2
        %s152 = scalar_lea.vmem %s2, %s151
      $region28: #{_voxelize_batch.5} parent=15 // pred_fallthru
        _
    $region16: #{_voxelize_batch.5} parent=5 // pred_fallthru
      _
    %p153 = scmp.le.s32.totalorder 1, %s9
    %p154 = scmp.lt.s32.totalorder %s9, 3
    %p155 = pnand %p153, %p154
    %p156 = pneg %p155
    // Predicated region
    $region29: #{_voxelize_batch.5} parent=5 // pred_check
      _
    $region30: #{_voxelize_batch.5} parent=5 // pred_check_branch
      %158 = sbr.rel (%p155) target = $region32
    $region31: #{_voxelize_batch.5} parent=5 // pred_region
      %s159 = ssub.s32 %s9, 1
      %p160 = scmp.lt.s32.totalorder %s14, 1
      %s161 = scalar_select %p160, %s14, 1
      %s162 = smul.addr %s161, 4
      %s163 = scalar_lea.vmem %s0, %s162
      %p164 = pneg %p35
      %p165 = pneg %p32
      %p166 = scmp.lt.s32.totalorder %s14, 1
      %s167 = scalar_select %p166, %s14, 1
      %s168 = smul.addr %s167, 2
      %s169 = scalar_lea.vmem %s1, %s168
      %p170 = pneg %p61
      %p171 = pneg %p58
      %p172 = scmp.lt.s32.totalorder %s14, 1
      %s173 = scalar_select %p172, %s14, 1
      %s174 = smul.addr %s173, 2
      %s175 = scalar_lea.vmem %s2, %s174
      %p176 = pneg %p87
      %p177 = pneg %p84
      %p178 = pneg %p113
      %p179 = pneg %p110
      %p180 = scmp.lt.s32.totalorder %s14, 1
      %s181 = scalar_select %p180, %s14, 1
      %s182 = smul.addr %s181, 2
      %s183 = smul.addr %s182, 4
      %s184 = scalar_lea.vmem %s3, %s183
      %p185 = scmp.lt.s32.totalorder %s14, 1
      %s186 = scalar_select %p185, %s14, 1
      %s187 = smul.addr %s186, 4
      %s188 = scalar_lea.vmem %s0, %s187
      %p189 = scmp.lt.s32.totalorder %s14, 1
      %s190 = scalar_select %p189, %s14, 1
      %s191 = smul.addr %s190, 2
      %s192 = scalar_lea.vmem %s1, %s191
      %p193 = scmp.lt.s32.totalorder %s14, 1
      %s194 = scalar_select %p193, %s14, 1
      %s195 = smul.addr %s194, 2
      %s196 = scalar_lea.vmem %s2, %s195
      %p197 = scmp.lt.s32.totalorder %s14, 1
      %s198 = scalar_select %p197, %s14, 1
      %s199 = smul.addr %s198, 2
      %s200 = smul.addr %s199, 4
      %s201 = scalar_lea.vmem %s3, %s200
      %v202 = vld [vmem:[%s188] sm:$0xf]
      %v203 = vld [vmem:[%s192] sm:$0x3]
      %v204 = vld [vmem:[%s196] sm:$0x3]
      %v205 = vlaneseq
      %v206 = vand.u32 %v205, 127
      %v207 = vadd.s32 %v206, 128
      %v208 = vand.u32 %v206, 7
      %v209 = vand.u32 %v207, 7
      %v210 = vlaneseq
      %v211 = vshrl.u32 %v210, 7
      %v212 = vsub.s32 0, %v211
      %v213 = vrot.slane %v204, %v212
      %v214 = vlaneseq
      %v215 = vshrl.u32 %v214, 7
      %v216 = vsub.s32 1, %v215
      %v217 = vrot.slane %v204, %v216
      %vm218 = vcmp.lt.s32.totalorder %v208, %v213
      %vm219 = vcmp.lt.s32.totalorder %v209, %v217
      %v220 = vlaneseq
      %v221 = vshrl.u32 %v220, 7
      %v222 = vsub.s32 0, %v221
      %v223 = vrot.slane %v203, %v222
      %v224 = vlaneseq
      %v225 = vshrl.u32 %v224, 7
      %v226 = vsub.s32 1, %v225
      %v227 = vrot.slane %v203, %v226
      %v228 = vsel %vm218, %v223, 4294967295
      %v229 = vsel %vm219, %v227, 4294967295
      %v230 = vlaneseq
      %v231 = vshrl.u32 %v230, 7
      %v232 = vadd.s32 %v231, 8
      %v233 = vadd.s32 %v231, 16
      %v234 = vadd.s32 %v231, 24
      %v235 = vadd.s32 %v231, 32
      %v236 = vadd.s32 %v231, 40
      %v237 = vadd.s32 %v231, 48
      %v238 = vadd.s32 %v231, 56
      %v239 = vadd.s32 %v231, 64
      %v240 = vadd.s32 %v231, 72
      %v241 = vadd.s32 %v231, 80
      %v242 = vadd.s32 %v231, 88
      %v243 = vadd.s32 %v231, 96
      %v244 = vadd.s32 %v231, 104
      %v245 = vadd.s32 %v231, 112
      %v246 = vadd.s32 %v231, 120
      %v247 = vlaneseq
      %v248 = vshrl.u32 %v247, 7
      %v249 = vsub.s32 0, %v248
      %v250 = vrot.slane %v228, %v249
      %v251 = vlaneseq
      %v252 = vshrl.u32 %v251, 7
      %v253 = vsub.s32 0, %v252
      %v254 = vrot.slane %v229, %v253
      %vm255 = vcmp.eq.s32.totalorder %v231, %v250
      %vm256 = vcmp.eq.s32.totalorder %v231, %v254
      %vm257 = vcmp.eq.s32.totalorder %v232, %v250
      %vm258 = vcmp.eq.s32.totalorder %v232, %v254
      %vm259 = vcmp.eq.s32.totalorder %v233, %v250
      %vm260 = vcmp.eq.s32.totalorder %v233, %v254
      %vm261 = vcmp.eq.s32.totalorder %v234, %v250
      %vm262 = vcmp.eq.s32.totalorder %v234, %v254
      %vm263 = vcmp.eq.s32.totalorder %v235, %v250
      %vm264 = vcmp.eq.s32.totalorder %v235, %v254
      %vm265 = vcmp.eq.s32.totalorder %v236, %v250
      %vm266 = vcmp.eq.s32.totalorder %v236, %v254
      %vm267 = vcmp.eq.s32.totalorder %v237, %v250
      %vm268 = vcmp.eq.s32.totalorder %v237, %v254
      %vm269 = vcmp.eq.s32.totalorder %v238, %v250
      %vm270 = vcmp.eq.s32.totalorder %v238, %v254
      %vm271 = vcmp.eq.s32.totalorder %v239, %v250
      %vm272 = vcmp.eq.s32.totalorder %v239, %v254
      %vm273 = vcmp.eq.s32.totalorder %v240, %v250
      %vm274 = vcmp.eq.s32.totalorder %v240, %v254
      %vm275 = vcmp.eq.s32.totalorder %v241, %v250
      %vm276 = vcmp.eq.s32.totalorder %v241, %v254
      %vm277 = vcmp.eq.s32.totalorder %v242, %v250
      %vm278 = vcmp.eq.s32.totalorder %v242, %v254
      %vm279 = vcmp.eq.s32.totalorder %v243, %v250
      %vm280 = vcmp.eq.s32.totalorder %v243, %v254
      %vm281 = vcmp.eq.s32.totalorder %v244, %v250
      %vm282 = vcmp.eq.s32.totalorder %v244, %v254
      %vm283 = vcmp.eq.s32.totalorder %v245, %v250
      %vm284 = vcmp.eq.s32.totalorder %v245, %v254
      %vm285 = vcmp.eq.s32.totalorder %v246, %v250
      %vm286 = vcmp.eq.s32.totalorder %v246, %v254
      %v287 = vsel %vm255, 1, 0
      %v288 = vsel %vm256, 1, 0
      %v289 = vsel %vm257, 1, 0
      %v290 = vsel %vm258, 1, 0
      %v291 = vsel %vm259, 1, 0
      %v292 = vsel %vm260, 1, 0
      %v293 = vsel %vm261, 1, 0
      %v294 = vsel %vm262, 1, 0
      %v295 = vsel %vm263, 1, 0
      %v296 = vsel %vm264, 1, 0
      %v297 = vsel %vm265, 1, 0
      %v298 = vsel %vm266, 1, 0
      %v299 = vsel %vm267, 1, 0
      %v300 = vsel %vm268, 1, 0
      %v301 = vsel %vm269, 1, 0
      %v302 = vsel %vm270, 1, 0
      %v303 = vsel %vm271, 1, 0
      %v304 = vsel %vm272, 1, 0
      %v305 = vsel %vm273, 1, 0
      %v306 = vsel %vm274, 1, 0
      %v307 = vsel %vm275, 1, 0
      %v308 = vsel %vm276, 1, 0
      %v309 = vsel %vm277, 1, 0
      %v310 = vsel %vm278, 1, 0
      %v311 = vsel %vm279, 1, 0
      %v312 = vsel %vm280, 1, 0
      %v313 = vsel %vm281, 1, 0
      %v314 = vsel %vm282, 1, 0
      %v315 = vsel %vm283, 1, 0
      %v316 = vsel %vm284, 1, 0
      %v317 = vsel %vm285, 1, 0
      %v318 = vsel %vm286, 1, 0
      %v319 = vcvt.s32.f32 %v287
      %v320 = vcvt.s32.f32 %v288
      %v321 = vcvt.s32.f32 %v289
      %v322 = vcvt.s32.f32 %v290
      %v323 = vcvt.s32.f32 %v291
      %v324 = vcvt.s32.f32 %v292
      %v325 = vcvt.s32.f32 %v293
      %v326 = vcvt.s32.f32 %v294
      %v327 = vcvt.s32.f32 %v295
      %v328 = vcvt.s32.f32 %v296
      %v329 = vcvt.s32.f32 %v297
      %v330 = vcvt.s32.f32 %v298
      %v331 = vcvt.s32.f32 %v299
      %v332 = vcvt.s32.f32 %v300
      %v333 = vcvt.s32.f32 %v301
      %v334 = vcvt.s32.f32 %v302
      %v335 = vcvt.s32.f32 %v303
      %v336 = vcvt.s32.f32 %v304
      %v337 = vcvt.s32.f32 %v305
      %v338 = vcvt.s32.f32 %v306
      %v339 = vcvt.s32.f32 %v307
      %v340 = vcvt.s32.f32 %v308
      %v341 = vcvt.s32.f32 %v309
      %v342 = vcvt.s32.f32 %v310
      %v343 = vcvt.s32.f32 %v311
      %v344 = vcvt.s32.f32 %v312
      %v345 = vcvt.s32.f32 %v313
      %v346 = vcvt.s32.f32 %v314
      %v347 = vcvt.s32.f32 %v315
      %v348 = vcvt.s32.f32 %v316
      %v349 = vcvt.s32.f32 %v317
      %v350 = vcvt.s32.f32 %v318
      %v351 = vand.u32 %v320, 4294901760
      %352 = vmatprep.subr.mxu0 %v351
      %v353 = vand.u32 %v319, 4294901760
      %354 = vmatpush1.msra.mxu0 %v353
      %v355 = vand.u32 %v322, 4294901760
      %356 = vmatprep.subr.mxu0 %v355
      %v357 = vand.u32 %v321, 4294901760
      %358 = vmatpush1.msra.mxu0 %v357
      %v359 = vand.u32 %v324, 4294901760
      %360 = vmatprep.subr.mxu0 %v359
      %v361 = vand.u32 %v323, 4294901760
      %362 = vmatpush1.msra.mxu0 %v361
      %v363 = vand.u32 %v326, 4294901760
      %364 = vmatprep.subr.mxu0 %v363
      %v365 = vand.u32 %v325, 4294901760
      %366 = vmatpush1.msra.mxu0 %v365
      %v367 = vand.u32 %v328, 4294901760
      %368 = vmatprep.subr.mxu0 %v367
      %v369 = vand.u32 %v327, 4294901760
      %370 = vmatpush1.msra.mxu0 %v369
      %v371 = vand.u32 %v330, 4294901760
      %372 = vmatprep.subr.mxu0 %v371
      %v373 = vand.u32 %v329, 4294901760
      %374 = vmatpush1.msra.mxu0 %v373
      %v375 = vand.u32 %v332, 4294901760
      %376 = vmatprep.subr.mxu0 %v375
      %v377 = vand.u32 %v331, 4294901760
      %378 = vmatpush1.msra.mxu0 %v377
      %v379 = vand.u32 %v334, 4294901760
      %380 = vmatprep.subr.mxu0 %v379
      %v381 = vand.u32 %v333, 4294901760
      %382 = vmatpush1.msra.mxu0 %v381
      %v383 = vand.u32 %v336, 4294901760
      %384 = vmatprep.subr.mxu0 %v383
      %v385 = vand.u32 %v335, 4294901760
      %386 = vmatpush1.msra.mxu0 %v385
      %v387 = vand.u32 %v338, 4294901760
      %388 = vmatprep.subr.mxu0 %v387
      %v389 = vand.u32 %v337, 4294901760
      %390 = vmatpush1.msra.mxu0 %v389
      %v391 = vand.u32 %v340, 4294901760
      %392 = vmatprep.subr.mxu0 %v391
      %v393 = vand.u32 %v339, 4294901760
      %394 = vmatpush1.msra.mxu0 %v393
      %v395 = vand.u32 %v342, 4294901760
      %396 = vmatprep.subr.mxu0 %v395
      %v397 = vand.u32 %v341, 4294901760
      %398 = vmatpush1.msra.mxu0 %v397
      %v399 = vand.u32 %v344, 4294901760
      %400 = vmatprep.subr.mxu0 %v399
      %v401 = vand.u32 %v343, 4294901760
      %402 = vmatpush1.msra.mxu0 %v401
      %v403 = vand.u32 %v346, 4294901760
      %404 = vmatprep.subr.mxu0 %v403
      %v405 = vand.u32 %v345, 4294901760
      %406 = vmatpush1.msra.mxu0 %v405
      %v407 = vand.u32 %v348, 4294901760
      %408 = vmatprep.subr.mxu0 %v407
      %v409 = vand.u32 %v347, 4294901760
      %410 = vmatpush1.msra.mxu0 %v409
      %v411 = vand.u32 %v350, 4294901760
      %412 = vmatprep.subr.mxu0 %v411
      %v413 = vand.u32 %v349, 4294901760
      %414 = vmatpush1.msra.mxu0 %v413
      %415 = vmatprep.subr.mxu0 0.0
      %416 = vmatpush1.msra.mxu0 0.0
      %417 = vmatprep.subr.mxu0 0.0
      %418 = vmatpush1.msra.mxu0 0.0
      %419 = vmatprep.subr.mxu0 0.0
      %420 = vmatpush1.msra.mxu0 0.0
      %421 = vmatprep.subr.mxu0 0.0
      %422 = vmatpush1.msra.mxu0 0.0
      %423 = vmatprep.subr.mxu0 0.0
      %424 = vmatpush1.msra.mxu0 0.0
      %425 = vmatprep.subr.mxu0 0.0
      %426 = vmatpush1.msra.mxu0 0.0
      %427 = vmatprep.subr.mxu0 0.0
      %428 = vmatpush1.msra.mxu0 0.0
      %429 = vmatprep.subr.mxu0 0.0
      %430 = vmatpush1.msra.mxu0 0.0
      %431 = vmatprep.subr.mxu0 0.0
      %432 = vmatpush1.msra.mxu0 0.0
      %433 = vmatprep.subr.mxu0 0.0
      %434 = vmatpush1.msra.mxu0 0.0
      %435 = vmatprep.subr.mxu0 0.0
      %436 = vmatpush1.msra.mxu0 0.0
      %437 = vmatprep.subr.mxu0 0.0
      %438 = vmatpush1.msra.mxu0 0.0
      %439 = vmatprep.subr.mxu0 0.0
      %440 = vmatpush1.msra.mxu0 0.0
      %441 = vmatprep.subr.mxu0 0.0
      %442 = vmatpush1.msra.mxu0 0.0
      %443 = vmatprep.subr.mxu0 0.0
      %444 = vmatpush1.msra.mxu0 0.0
      %445 = vmatprep.subr.mxu0 0.0
      %446 = vmatpush1.msra.mxu0 0.0
      %447 = vmatprep.mubr.f32.mxu0 0.0
      %v448 = vand.u32 %v202, 4294901760
      %v449 = vsub.f32 %v202, %v448
      %v450 = vand.u32 %v449, 4294901760
      %v451 = vsub.f32 %v449, %v450
      %v452 = vand.u32 %v451, 4294901760
      %453 = vmatmul.mubr.f32.gmra.mrb[0].mxu0 %v452
      %v454 = vpop.f32.mrb[0].mxu0
      %v455 = vadd.f32 0.0, %v454
      %v456 = vpop.f32.mrb[0].mxu0
      %v457 = vadd.f32 0.0, %v456
      %458 = vdwg.mxu0
      %v459 = vand.u32 %v320, 4294901760
      %v460 = vsub.f32 %v320, %v459
      %v461 = vand.u32 %v460, 4294901760
      %v462 = vsub.f32 %v460, %v461
      %v463 = vand.u32 %v462, 4294901760
      %464 = vmatprep.subr.mxu0 %v463
      %v465 = vand.u32 %v319, 4294901760
      %v466 = vsub.f32 %v319, %v465
      %v467 = vand.u32 %v466, 4294901760
      %v468 = vsub.f32 %v466, %v467
      %v469 = vand.u32 %v468, 4294901760
      %470 = vmatpush1.msra.mxu0 %v469
      %v471 = vand.u32 %v322, 4294901760
      %v472 = vsub.f32 %v322, %v471
      %v473 = vand.u32 %v472, 4294901760
      %v474 = vsub.f32 %v472, %v473
      %v475 = vand.u32 %v474, 4294901760
      %476 = vmatprep.subr.mxu0 %v475
      %v477 = vand.u32 %v321, 4294901760
      %v478 = vsub.f32 %v321, %v477
      %v479 = vand.u32 %v478, 4294901760
      %v480 = vsub.f32 %v478, %v479
      %v481 = vand.u32 %v480, 4294901760
      %482 = vmatpush1.msra.mxu0 %v481
      %v483 = vand.u32 %v324, 4294901760
      %v484 = vsub.f32 %v324, %v483
      %v485 = vand.u32 %v484, 4294901760
      %v486 = vsub.f32 %v484, %v485
      %v487 = vand.u32 %v486, 4294901760
      %488 = vmatprep.subr.mxu0 %v487
      %v489 = vand.u32 %v323, 4294901760
      %v490 = vsub.f32 %v323, %v489
      %v491 = vand.u32 %v490, 4294901760
      %v492 = vsub.f32 %v490, %v491
      %v493 = vand.u32 %v492, 4294901760
      %494 = vmatpush1.msra.mxu0 %v493
      %v495 = vand.u32 %v326, 4294901760
      %v496 = vsub.f32 %v326, %v495
      %v497 = vand.u32 %v496, 4294901760
      %v498 = vsub.f32 %v496, %v497
      %v499 = vand.u32 %v498, 4294901760
      %500 = vmatprep.subr.mxu0 %v499
      %v501 = vand.u32 %v325, 4294901760
      %v502 = vsub.f32 %v325, %v501
      %v503 = vand.u32 %v502, 4294901760
      %v504 = vsub.f32 %v502, %v503
      %v505 = vand.u32 %v504, 4294901760
      %506 = vmatpush1.msra.mxu0 %v505
      %v507 = vand.u32 %v328, 4294901760
      %v508 = vsub.f32 %v328, %v507
      %v509 = vand.u32 %v508, 4294901760
      %v510 = vsub.f32 %v508, %v509
      %v511 = vand.u32 %v510, 4294901760
      %512 = vmatprep.subr.mxu0 %v511
      %v513 = vand.u32 %v327, 4294901760
      %v514 = vsub.f32 %v327, %v513
      %v515 = vand.u32 %v514, 4294901760
      %v516 = vsub.f32 %v514, %v515
      %v517 = vand.u32 %v516, 4294901760
      %518 = vmatpush1.msra.mxu0 %v517
      %v519 = vand.u32 %v330, 4294901760
      %v520 = vsub.f32 %v330, %v519
      %v521 = vand.u32 %v520, 4294901760
      %v522 = vsub.f32 %v520, %v521
      %v523 = vand.u32 %v522, 4294901760
      %524 = vmatprep.subr.mxu0 %v523
      %v525 = vand.u32 %v329, 4294901760
      %v526 = vsub.f32 %v329, %v525
      %v527 = vand.u32 %v526, 4294901760
      %v528 = vsub.f32 %v526, %v527
      %v529 = vand.u32 %v528, 4294901760
      %530 = vmatpush1.msra.mxu0 %v529
      %v531 = vand.u32 %v332, 4294901760
      %v532 = vsub.f32 %v332, %v531
      %v533 = vand.u32 %v532, 4294901760
      %v534 = vsub.f32 %v532, %v533
      %v535 = vand.u32 %v534, 4294901760
      %536 = vmatprep.subr.mxu0 %v535
      %v537 = vand.u32 %v331, 4294901760
      %v538 = vsub.f32 %v331, %v537
      %v539 = vand.u32 %v538, 4294901760
      %v540 = vsub.f32 %v538, %v539
      %v541 = vand.u32 %v540, 4294901760
      %542 = vmatpush1.msra.mxu0 %v541
      %v543 = vand.u32 %v334, 4294901760
      %v544 = vsub.f32 %v334, %v543
      %v545 = vand.u32 %v544, 4294901760
      %v546 = vsub.f32 %v544, %v545
      %v547 = vand.u32 %v546, 4294901760
      %548 = vmatprep.subr.mxu0 %v547
      %v549 = vand.u32 %v333, 4294901760
      %v550 = vsub.f32 %v333, %v549
      %v551 = vand.u32 %v550, 4294901760
      %v552 = vsub.f32 %v550, %v551
      %v553 = vand.u32 %v552, 4294901760
      %554 = vmatpush1.msra.mxu0 %v553
      %v555 = vand.u32 %v336, 4294901760
      %v556 = vsub.f32 %v336, %v555
      %v557 = vand.u32 %v556, 4294901760
      %v558 = vsub.f32 %v556, %v557
      %v559 = vand.u32 %v558, 4294901760
      %560 = vmatprep.subr.mxu0 %v559
      %v561 = vand.u32 %v335, 4294901760
      %v562 = vsub.f32 %v335, %v561
      %v563 = vand.u32 %v562, 4294901760
      %v564 = vsub.f32 %v562, %v563
      %v565 = vand.u32 %v564, 4294901760
      %566 = vmatpush1.msra.mxu0 %v565
      %v567 = vand.u32 %v338, 4294901760
      %v568 = vsub.f32 %v338, %v567
      %v569 = vand.u32 %v568, 4294901760
      %v570 = vsub.f32 %v568, %v569
      %v571 = vand.u32 %v570, 4294901760
      %572 = vmatprep.subr.mxu0 %v571
      %v573 = vand.u32 %v337, 4294901760
      %v574 = vsub.f32 %v337, %v573
      %v575 = vand.u32 %v574, 4294901760
      %v576 = vsub.f32 %v574, %v575
      %v577 = vand.u32 %v576, 4294901760
      %578 = vmatpush1.msra.mxu0 %v577
      %v579 = vand.u32 %v340, 4294901760
      %v580 = vsub.f32 %v340, %v579
      %v581 = vand.u32 %v580, 4294901760
      %v582 = vsub.f32 %v580, %v581
      %v583 = vand.u32 %v582, 4294901760
      %584 = vmatprep.subr.mxu0 %v583
      %v585 = vand.u32 %v339, 4294901760
      %v586 = vsub.f32 %v339, %v585
      %v587 = vand.u32 %v586, 4294901760
      %v588 = vsub.f32 %v586, %v587
      %v589 = vand.u32 %v588, 4294901760
      %590 = vmatpush1.msra.mxu0 %v589
      %v591 = vand.u32 %v342, 4294901760
      %v592 = vsub.f32 %v342, %v591
      %v593 = vand.u32 %v592, 4294901760
      %v594 = vsub.f32 %v592, %v593
      %v595 = vand.u32 %v594, 4294901760
      %596 = vmatprep.subr.mxu0 %v595
      %v597 = vand.u32 %v341, 4294901760
      %v598 = vsub.f32 %v341, %v597
      %v599 = vand.u32 %v598, 4294901760
      %v600 = vsub.f32 %v598, %v599
      %v601 = vand.u32 %v600, 4294901760
      %602 = vmatpush1.msra.mxu0 %v601
      %v603 = vand.u32 %v344, 4294901760
      %v604 = vsub.f32 %v344, %v603
      %v605 = vand.u32 %v604, 4294901760
      %v606 = vsub.f32 %v604, %v605
      %v607 = vand.u32 %v606, 4294901760
      %608 = vmatprep.subr.mxu0 %v607
      %v609 = vand.u32 %v343, 4294901760
      %v610 = vsub.f32 %v343, %v609
      %v611 = vand.u32 %v610, 4294901760
      %v612 = vsub.f32 %v610, %v611
      %v613 = vand.u32 %v612, 4294901760
      %614 = vmatpush1.msra.mxu0 %v613
      %v615 = vand.u32 %v346, 4294901760
      %v616 = vsub.f32 %v346, %v615
      %v617 = vand.u32 %v616, 4294901760
      %v618 = vsub.f32 %v616, %v617
      %v619 = vand.u32 %v618, 4294901760
      %620 = vmatprep.subr.mxu0 %v619
      %v621 = vand.u32 %v345, 4294901760
      %v622 = vsub.f32 %v345, %v621
      %v623 = vand.u32 %v622, 4294901760
      %v624 = vsub.f32 %v622, %v623
      %v625 = vand.u32 %v624, 4294901760
      %626 = vmatpush1.msra.mxu0 %v625
      %v627 = vand.u32 %v348, 4294901760
      %v628 = vsub.f32 %v348, %v627
      %v629 = vand.u32 %v628, 4294901760
      %v630 = vsub.f32 %v628, %v629
      %v631 = vand.u32 %v630, 4294901760
      %632 = vmatprep.subr.mxu0 %v631
      %v633 = vand.u32 %v347, 4294901760
      %v634 = vsub.f32 %v347, %v633
      %v635 = vand.u32 %v634, 4294901760
      %v636 = vsub.f32 %v634, %v635
      %v637 = vand.u32 %v636, 4294901760
      %638 = vmatpush1.msra.mxu0 %v637
      %v639 = vand.u32 %v350, 4294901760
      %v640 = vsub.f32 %v350, %v639
      %v641 = vand.u32 %v640, 4294901760
      %v642 = vsub.f32 %v640, %v641
      %v643 = vand.u32 %v642, 4294901760
      %644 = vmatprep.subr.mxu0 %v643
      %v645 = vand.u32 %v349, 4294901760
      %v646 = vsub.f32 %v349, %v645
      %v647 = vand.u32 %v646, 4294901760
      %v648 = vsub.f32 %v646, %v647
      %v649 = vand.u32 %v648, 4294901760
      %650 = vmatpush1.msra.mxu0 %v649
      %651 = vmatprep.subr.mxu0 0.0
      %652 = vmatpush1.msra.mxu0 0.0
      %653 = vmatprep.subr.mxu0 0.0
      %654 = vmatpush1.msra.mxu0 0.0
      %655 = vmatprep.subr.mxu0 0.0
      %656 = vmatpush1.msra.mxu0 0.0
      %657 = vmatprep.subr.mxu0 0.0
      %658 = vmatpush1.msra.mxu0 0.0
      %659 = vmatprep.subr.mxu0 0.0
      %660 = vmatpush1.msra.mxu0 0.0
      %661 = vmatprep.subr.mxu0 0.0
      %662 = vmatpush1.msra.mxu0 0.0
      %663 = vmatprep.subr.mxu0 0.0
      %664 = vmatpush1.msra.mxu0 0.0
      %665 = vmatprep.subr.mxu0 0.0
      %666 = vmatpush1.msra.mxu0 0.0
      %667 = vmatprep.subr.mxu0 0.0
      %668 = vmatpush1.msra.mxu0 0.0
      %669 = vmatprep.subr.mxu0 0.0
      %670 = vmatpush1.msra.mxu0 0.0
      %671 = vmatprep.subr.mxu0 0.0
      %672 = vmatpush1.msra.mxu0 0.0
      %673 = vmatprep.subr.mxu0 0.0
      %674 = vmatpush1.msra.mxu0 0.0
      %675 = vmatprep.subr.mxu0 0.0
      %676 = vmatpush1.msra.mxu0 0.0
      %677 = vmatprep.subr.mxu0 0.0
      %678 = vmatpush1.msra.mxu0 0.0
      %679 = vmatprep.subr.mxu0 0.0
      %680 = vmatpush1.msra.mxu0 0.0
      %681 = vmatprep.subr.mxu0 0.0
      %682 = vmatpush1.msra.mxu0 0.0
      %683 = vmatprep.mubr.f32.mxu0 0.0
      %v684 = vand.u32 %v202, 4294901760
      %685 = vmatmul.mubr.f32.gmra.mrb[0].mxu0 %v684
      %v686 = vpop.f32.mrb[0].mxu0
      %v687 = vadd.f32 %v455, %v686
      %v688 = vpop.f32.mrb[0].mxu0
      %v689 = vadd.f32 %v457, %v688
      %690 = vdwg.mxu0
      %v691 = vand.u32 %v320, 4294901760
      %v692 = vsub.f32 %v320, %v691
      %693 = vmatprep.subr.mxu0 %v692
      %v694 = vand.u32 %v319, 4294901760
      %v695 = vsub.f32 %v319, %v694
      %696 = vmatpush1.msra.mxu0 %v695
      %v697 = vand.u32 %v322, 4294901760
      %v698 = vsub.f32 %v322, %v697
      %699 = vmatprep.subr.mxu0 %v698
      %v700 = vand.u32 %v321, 4294901760
      %v701 = vsub.f32 %v321, %v700
      %702 = vmatpush1.msra.mxu0 %v701
      %v703 = vand.u32 %v324, 4294901760
      %v704 = vsub.f32 %v324, %v703
      %705 = vmatprep.subr.mxu0 %v704
      %v706 = vand.u32 %v323, 4294901760
      %v707 = vsub.f32 %v323, %v706
      %708 = vmatpush1.msra.mxu0 %v707
      %v709 = vand.u32 %v326, 4294901760
      %v710 = vsub.f32 %v326, %v709
      %711 = vmatprep.subr.mxu0 %v710
      %v712 = vand.u32 %v325, 4294901760
      %v713 = vsub.f32 %v325, %v712
      %714 = vmatpush1.msra.mxu0 %v713
      %v715 = vand.u32 %v328, 4294901760
      %v716 = vsub.f32 %v328, %v715
      %717 = vmatprep.subr.mxu0 %v716
      %v718 = vand.u32 %v327, 4294901760
      %v719 = vsub.f32 %v327, %v718
      %720 = vmatpush1.msra.mxu0 %v719
      %v721 = vand.u32 %v330, 4294901760
      %v722 = vsub.f32 %v330, %v721
      %723 = vmatprep.subr.mxu0 %v722
      %v724 = vand.u32 %v329, 4294901760
      %v725 = vsub.f32 %v329, %v724
      %726 = vmatpush1.msra.mxu0 %v725
      %v727 = vand.u32 %v332, 4294901760
      %v728 = vsub.f32 %v332, %v727
      %729 = vmatprep.subr.mxu0 %v728
      %v730 = vand.u32 %v331, 4294901760
      %v731 = vsub.f32 %v331, %v730
      %732 = vmatpush1.msra.mxu0 %v731
      %v733 = vand.u32 %v334, 4294901760
      %v734 = vsub.f32 %v334, %v733
      %735 = vmatprep.subr.mxu0 %v734
      %v736 = vand.u32 %v333, 4294901760
      %v737 = vsub.f32 %v333, %v736
      %738 = vmatpush1.msra.mxu0 %v737
      %v739 = vand.u32 %v336, 4294901760
      %v740 = vsub.f32 %v336, %v739
      %741 = vmatprep.subr.mxu0 %v740
      %v742 = vand.u32 %v335, 4294901760
      %v743 = vsub.f32 %v335, %v742
      %744 = vmatpush1.msra.mxu0 %v743
      %v745 = vand.u32 %v338, 4294901760
      %v746 = vsub.f32 %v338, %v745
      %747 = vmatprep.subr.mxu0 %v746
      %v748 = vand.u32 %v337, 4294901760
      %v749 = vsub.f32 %v337, %v748
      %750 = vmatpush1.msra.mxu0 %v749
      %v751 = vand.u32 %v340, 4294901760
      %v752 = vsub.f32 %v340, %v751
      %753 = vmatprep.subr.mxu0 %v752
      %v754 = vand.u32 %v339, 4294901760
      %v755 = vsub.f32 %v339, %v754
      %756 = vmatpush1.msra.mxu0 %v755
      %v757 = vand.u32 %v342, 4294901760
      %v758 = vsub.f32 %v342, %v757
      %759 = vmatprep.subr.mxu0 %v758
      %v760 = vand.u32 %v341, 4294901760
      %v761 = vsub.f32 %v341, %v760
      %762 = vmatpush1.msra.mxu0 %v761
      %v763 = vand.u32 %v344, 4294901760
      %v764 = vsub.f32 %v344, %v763
      %765 = vmatprep.subr.mxu0 %v764
      %v766 = vand.u32 %v343, 4294901760
      %v767 = vsub.f32 %v343, %v766
      %768 = vmatpush1.msra.mxu0 %v767
      %v769 = vand.u32 %v346, 4294901760
      %v770 = vsub.f32 %v346, %v769
      %771 = vmatprep.subr.mxu0 %v770
      %v772 = vand.u32 %v345, 4294901760
      %v773 = vsub.f32 %v345, %v772
      %774 = vmatpush1.msra.mxu0 %v773
      %v775 = vand.u32 %v348, 4294901760
      %v776 = vsub.f32 %v348, %v775
      %777 = vmatprep.subr.mxu0 %v776
      %v778 = vand.u32 %v347, 4294901760
      %v779 = vsub.f32 %v347, %v778
      %780 = vmatpush1.msra.mxu0 %v779
      %v781 = vand.u32 %v350, 4294901760
      %v782 = vsub.f32 %v350, %v781
      %783 = vmatprep.subr.mxu0 %v782
      %v784 = vand.u32 %v349, 4294901760
      %v785 = vsub.f32 %v349, %v784
      %786 = vmatpush1.msra.mxu0 %v785
      %787 = vmatprep.subr.mxu0 0.0
      %788 = vmatpush1.msra.mxu0 0.0
      %789 = vmatprep.subr.mxu0 0.0
      %790 = vmatpush1.msra.mxu0 0.0
      %791 = vmatprep.subr.mxu0 0.0
      %792 = vmatpush1.msra.mxu0 0.0
      %793 = vmatprep.subr.mxu0 0.0
      %794 = vmatpush1.msra.mxu0 0.0
      %795 = vmatprep.subr.mxu0 0.0
      %796 = vmatpush1.msra.mxu0 0.0
      %797 = vmatprep.subr.mxu0 0.0
      %798 = vmatpush1.msra.mxu0 0.0
      %799 = vmatprep.subr.mxu0 0.0
      %800 = vmatpush1.msra.mxu0 0.0
      %801 = vmatprep.subr.mxu0 0.0
      %802 = vmatpush1.msra.mxu0 0.0
      %803 = vmatprep.subr.mxu0 0.0
      %804 = vmatpush1.msra.mxu0 0.0
      %805 = vmatprep.subr.mxu0 0.0
      %806 = vmatpush1.msra.mxu0 0.0
      %807 = vmatprep.subr.mxu0 0.0
      %808 = vmatpush1.msra.mxu0 0.0
      %809 = vmatprep.subr.mxu0 0.0
      %810 = vmatpush1.msra.mxu0 0.0
      %811 = vmatprep.subr.mxu0 0.0
      %812 = vmatpush1.msra.mxu0 0.0
      %813 = vmatprep.subr.mxu0 0.0
      %814 = vmatpush1.msra.mxu0 0.0
      %815 = vmatprep.subr.mxu0 0.0
      %816 = vmatpush1.msra.mxu0 0.0
      %817 = vmatprep.subr.mxu0 0.0
      %818 = vmatpush1.msra.mxu0 0.0
      %819 = vmatprep.mubr.f32.mxu0 0.0
      %v820 = vand.u32 %v202, 4294901760
      %v821 = vsub.f32 %v202, %v820
      %822 = vmatmul.mubr.f32.gmra.mrb[0].mxu0 %v821
      %v823 = vpop.f32.mrb[0].mxu0
      %v824 = vadd.f32 %v687, %v823
      %v825 = vpop.f32.mrb[0].mxu0
      %v826 = vadd.f32 %v689, %v825
      %827 = vdwg.mxu0
      %v828 = vand.u32 %v320, 4294901760
      %829 = vmatprep.subr.mxu0 %v828
      %v830 = vand.u32 %v319, 4294901760
      %831 = vmatpush1.msra.mxu0 %v830
      %v832 = vand.u32 %v322, 4294901760
      %833 = vmatprep.subr.mxu0 %v832
      %v834 = vand.u32 %v321, 4294901760
      %835 = vmatpush1.msra.mxu0 %v834
      %v836 = vand.u32 %v324, 4294901760
      %837 = vmatprep.subr.mxu0 %v836
      %v838 = vand.u32 %v323, 4294901760
      %839 = vmatpush1.msra.mxu0 %v838
      %v840 = vand.u32 %v326, 4294901760
      %841 = vmatprep.subr.mxu0 %v840
      %v842 = vand.u32 %v325, 4294901760
      %843 = vmatpush1.msra.mxu0 %v842
      %v844 = vand.u32 %v328, 4294901760
      %845 = vmatprep.subr.mxu0 %v844
      %v846 = vand.u32 %v327, 4294901760
      %847 = vmatpush1.msra.mxu0 %v846
      %v848 = vand.u32 %v330, 4294901760
      %849 = vmatprep.subr.mxu0 %v848
      %v850 = vand.u32 %v329, 4294901760
      %851 = vmatpush1.msra.mxu0 %v850
      %v852 = vand.u32 %v332, 4294901760
      %853 = vmatprep.subr.mxu0 %v852
      %v854 = vand.u32 %v331, 4294901760
      %855 = vmatpush1.msra.mxu0 %v854
      %v856 = vand.u32 %v334, 4294901760
      %857 = vmatprep.subr.mxu0 %v856
      %v858 = vand.u32 %v333, 4294901760
      %859 = vmatpush1.msra.mxu0 %v858
      %v860 = vand.u32 %v336, 4294901760
      %861 = vmatprep.subr.mxu0 %v860
      %v862 = vand.u32 %v335, 4294901760
      %863 = vmatpush1.msra.mxu0 %v862
      %v864 = vand.u32 %v338, 4294901760
      %865 = vmatprep.subr.mxu0 %v864
      %v866 = vand.u32 %v337, 4294901760
      %867 = vmatpush1.msra.mxu0 %v866
      %v868 = vand.u32 %v340, 4294901760
      %869 = vmatprep.subr.mxu0 %v868
      %v870 = vand.u32 %v339, 4294901760
      %871 = vmatpush1.msra.mxu0 %v870
      %v872 = vand.u32 %v342, 4294901760
      %873 = vmatprep.subr.mxu0 %v872
      %v874 = vand.u32 %v341, 4294901760
      %875 = vmatpush1.msra.mxu0 %v874
      %v876 = vand.u32 %v344, 4294901760
      %877 = vmatprep.subr.mxu0 %v876
      %v878 = vand.u32 %v343, 4294901760
      %879 = vmatpush1.msra.mxu0 %v878
      %v880 = vand.u32 %v346, 4294901760
      %881 = vmatprep.subr.mxu0 %v880
      %v882 = vand.u32 %v345, 4294901760
      %883 = vmatpush1.msra.mxu0 %v882
      %v884 = vand.u32 %v348, 4294901760
      %885 = vmatprep.subr.mxu0 %v884
      %v886 = vand.u32 %v347, 4294901760
      %887 = vmatpush1.msra.mxu0 %v886
      %v888 = vand.u32 %v350, 4294901760
      %889 = vmatprep.subr.mxu0 %v888
      %v890 = vand.u32 %v349, 4294901760
      %891 = vmatpush1.msra.mxu0 %v890
      %892 = vmatprep.subr.mxu0 0.0
      %893 = vmatpush1.msra.mxu0 0.0
      %894 = vmatprep.subr.mxu0 0.0
      %895 = vmatpush1.msra.mxu0 0.0
      %896 = vmatprep.subr.mxu0 0.0
      %897 = vmatpush1.msra.mxu0 0.0
      %898 = vmatprep.subr.mxu0 0.0
      %899 = vmatpush1.msra.mxu0 0.0
      %900 = vmatprep.subr.mxu0 0.0
      %901 = vmatpush1.msra.mxu0 0.0
      %902 = vmatprep.subr.mxu0 0.0
      %903 = vmatpush1.msra.mxu0 0.0
      %904 = vmatprep.subr.mxu0 0.0
      %905 = vmatpush1.msra.mxu0 0.0
      %906 = vmatprep.subr.mxu0 0.0
      %907 = vmatpush1.msra.mxu0 0.0
      %908 = vmatprep.subr.mxu0 0.0
      %909 = vmatpush1.msra.mxu0 0.0
      %910 = vmatprep.subr.mxu0 0.0
      %911 = vmatpush1.msra.mxu0 0.0
      %912 = vmatprep.subr.mxu0 0.0
      %913 = vmatpush1.msra.mxu0 0.0
      %914 = vmatprep.subr.mxu0 0.0
      %915 = vmatpush1.msra.mxu0 0.0
      %916 = vmatprep.subr.mxu0 0.0
      %917 = vmatpush1.msra.mxu0 0.0
      %918 = vmatprep.subr.mxu0 0.0
      %919 = vmatpush1.msra.mxu0 0.0
      %920 = vmatprep.subr.mxu0 0.0
      %921 = vmatpush1.msra.mxu0 0.0
      %922 = vmatprep.subr.mxu0 0.0
      %923 = vmatpush1.msra.mxu0 0.0
      %924 = vmatprep.mubr.f32.mxu0 0.0
      %v925 = vand.u32 %v202, 4294901760
      %v926 = vsub.f32 %v202, %v925
      %v927 = vand.u32 %v926, 4294901760
      %928 = vmatmul.mubr.f32.gmra.mrb[0].mxu0 %v927
      %v929 = vpop.f32.mrb[0].mxu0
      %v930 = vadd.f32 %v824, %v929
      %v931 = vpop.f32.mrb[0].mxu0
      %v932 = vadd.f32 %v826, %v931
      %933 = vdwg.mxu0
      %v934 = vand.u32 %v320, 4294901760
      %v935 = vsub.f32 %v320, %v934
      %v936 = vand.u32 %v935, 4294901760
      %937 = vmatprep.subr.mxu0 %v936
      %v938 = vand.u32 %v319, 4294901760
      %v939 = vsub.f32 %v319, %v938
      %v940 = vand.u32 %v939, 4294901760
      %941 = vmatpush1.msra.mxu0 %v940
      %v942 = vand.u32 %v322, 4294901760
      %v943 = vsub.f32 %v322, %v942
      %v944 = vand.u32 %v943, 4294901760
      %945 = vmatprep.subr.mxu0 %v944
      %v946 = vand.u32 %v321, 4294901760
      %v947 = vsub.f32 %v321, %v946
      %v948 = vand.u32 %v947, 4294901760
      %949 = vmatpush1.msra.mxu0 %v948
      %v950 = vand.u32 %v324, 4294901760
      %v951 = vsub.f32 %v324, %v950
      %v952 = vand.u32 %v951, 4294901760
      %953 = vmatprep.subr.mxu0 %v952
      %v954 = vand.u32 %v323, 4294901760
      %v955 = vsub.f32 %v323, %v954
      %v956 = vand.u32 %v955, 4294901760
      %957 = vmatpush1.msra.mxu0 %v956
      %v958 = vand.u32 %v326, 4294901760
      %v959 = vsub.f32 %v326, %v958
      %v960 = vand.u32 %v959, 4294901760
      %961 = vmatprep.subr.mxu0 %v960
      %v962 = vand.u32 %v325, 4294901760
      %v963 = vsub.f32 %v325, %v962
      %v964 = vand.u32 %v963, 4294901760
      %965 = vmatpush1.msra.mxu0 %v964
      %v966 = vand.u32 %v328, 4294901760
      %v967 = vsub.f32 %v328, %v966
      %v968 = vand.u32 %v967, 4294901760
      %969 = vmatprep.subr.mxu0 %v968
      %v970 = vand.u32 %v327, 4294901760
      %v971 = vsub.f32 %v327, %v970
      %v972 = vand.u32 %v971, 4294901760
      %973 = vmatpush1.msra.mxu0 %v972
      %v974 = vand.u32 %v330, 4294901760
      %v975 = vsub.f32 %v330, %v974
      %v976 = vand.u32 %v975, 4294901760
      %977 = vmatprep.subr.mxu0 %v976
      %v978 = vand.u32 %v329, 4294901760
      %v979 = vsub.f32 %v329, %v978
      %v980 = vand.u32 %v979, 4294901760
      %981 = vmatpush1.msra.mxu0 %v980
      %v982 = vand.u32 %v332, 4294901760
      %v983 = vsub.f32 %v332, %v982
      %v984 = vand.u32 %v983, 4294901760
      %985 = vmatprep.subr.mxu0 %v984
      %v986 = vand.u32 %v331, 4294901760
      %v987 = vsub.f32 %v331, %v986
      %v988 = vand.u32 %v987, 4294901760
      %989 = vmatpush1.msra.mxu0 %v988
      %v990 = vand.u32 %v334, 4294901760
      %v991 = vsub.f32 %v334, %v990
      %v992 = vand.u32 %v991, 4294901760
      %993 = vmatprep.subr.mxu0 %v992
      %v994 = vand.u32 %v333, 4294901760
      %v995 = vsub.f32 %v333, %v994
      %v996 = vand.u32 %v995, 4294901760
      %997 = vmatpush1.msra.mxu0 %v996
      %v998 = vand.u32 %v336, 4294901760
      %v999 = vsub.f32 %v336, %v998
      %v1000 = vand.u32 %v999, 4294901760
      %1001 = vmatprep.subr.mxu0 %v1000
      %v1002 = vand.u32 %v335, 4294901760
      %v1003 = vsub.f32 %v335, %v1002
      %v1004 = vand.u32 %v1003, 4294901760
      %1005 = vmatpush1.msra.mxu0 %v1004
      %v1006 = vand.u32 %v338, 4294901760
      %v1007 = vsub.f32 %v338, %v1006
      %v1008 = vand.u32 %v1007, 4294901760
      %1009 = vmatprep.subr.mxu0 %v1008
      %v1010 = vand.u32 %v337, 4294901760
      %v1011 = vsub.f32 %v337, %v1010
      %v1012 = vand.u32 %v1011, 4294901760
      %1013 = vmatpush1.msra.mxu0 %v1012
      %v1014 = vand.u32 %v340, 4294901760
      %v1015 = vsub.f32 %v340, %v1014
      %v1016 = vand.u32 %v1015, 4294901760
      %1017 = vmatprep.subr.mxu0 %v1016
      %v1018 = vand.u32 %v339, 4294901760
      %v1019 = vsub.f32 %v339, %v1018
      %v1020 = vand.u32 %v1019, 4294901760
      %1021 = vmatpush1.msra.mxu0 %v1020
      %v1022 = vand.u32 %v342, 4294901760
      %v1023 = vsub.f32 %v342, %v1022
      %v1024 = vand.u32 %v1023, 4294901760
      %1025 = vmatprep.subr.mxu0 %v1024
      %v1026 = vand.u32 %v341, 4294901760
      %v1027 = vsub.f32 %v341, %v1026
      %v1028 = vand.u32 %v1027, 4294901760
      %1029 = vmatpush1.msra.mxu0 %v1028
      %v1030 = vand.u32 %v344, 4294901760
      %v1031 = vsub.f32 %v344, %v1030
      %v1032 = vand.u32 %v1031, 4294901760
      %1033 = vmatprep.subr.mxu0 %v1032
      %v1034 = vand.u32 %v343, 4294901760
      %v1035 = vsub.f32 %v343, %v1034
      %v1036 = vand.u32 %v1035, 4294901760
      %1037 = vmatpush1.msra.mxu0 %v1036
      %v1038 = vand.u32 %v346, 4294901760
      %v1039 = vsub.f32 %v346, %v1038
      %v1040 = vand.u32 %v1039, 4294901760
      %1041 = vmatprep.subr.mxu0 %v1040
      %v1042 = vand.u32 %v345, 4294901760
      %v1043 = vsub.f32 %v345, %v1042
      %v1044 = vand.u32 %v1043, 4294901760
      %1045 = vmatpush1.msra.mxu0 %v1044
      %v1046 = vand.u32 %v348, 4294901760
      %v1047 = vsub.f32 %v348, %v1046
      %v1048 = vand.u32 %v1047, 4294901760
      %1049 = vmatprep.subr.mxu0 %v1048
      %v1050 = vand.u32 %v347, 4294901760
      %v1051 = vsub.f32 %v347, %v1050
      %v1052 = vand.u32 %v1051, 4294901760
      %1053 = vmatpush1.msra.mxu0 %v1052
      %v1054 = vand.u32 %v350, 4294901760
      %v1055 = vsub.f32 %v350, %v1054
      %v1056 = vand.u32 %v1055, 4294901760
      %1057 = vmatprep.subr.mxu0 %v1056
      %v1058 = vand.u32 %v349, 4294901760
      %v1059 = vsub.f32 %v349, %v1058
      %v1060 = vand.u32 %v1059, 4294901760
      %1061 = vmatpush1.msra.mxu0 %v1060
      %1062 = vmatprep.subr.mxu0 0.0
      %1063 = vmatpush1.msra.mxu0 0.0
      %1064 = vmatprep.subr.mxu0 0.0
      %1065 = vmatpush1.msra.mxu0 0.0
      %1066 = vmatprep.subr.mxu0 0.0
      %1067 = vmatpush1.msra.mxu0 0.0
      %1068 = vmatprep.subr.mxu0 0.0
      %1069 = vmatpush1.msra.mxu0 0.0
      %1070 = vmatprep.subr.mxu0 0.0
      %1071 = vmatpush1.msra.mxu0 0.0
      %1072 = vmatprep.subr.mxu0 0.0
      %1073 = vmatpush1.msra.mxu0 0.0
      %1074 = vmatprep.subr.mxu0 0.0
      %1075 = vmatpush1.msra.mxu0 0.0
      %1076 = vmatprep.subr.mxu0 0.0
      %1077 = vmatpush1.msra.mxu0 0.0
      %1078 = vmatprep.subr.mxu0 0.0
      %1079 = vmatpush1.msra.mxu0 0.0
      %1080 = vmatprep.subr.mxu0 0.0
      %1081 = vmatpush1.msra.mxu0 0.0
      %1082 = vmatprep.subr.mxu0 0.0
      %1083 = vmatpush1.msra.mxu0 0.0
      %1084 = vmatprep.subr.mxu0 0.0
      %1085 = vmatpush1.msra.mxu0 0.0
      %1086 = vmatprep.subr.mxu0 0.0
      %1087 = vmatpush1.msra.mxu0 0.0
      %1088 = vmatprep.subr.mxu0 0.0
      %1089 = vmatpush1.msra.mxu0 0.0
      %1090 = vmatprep.subr.mxu0 0.0
      %1091 = vmatpush1.msra.mxu0 0.0
      %1092 = vmatprep.subr.mxu0 0.0
      %1093 = vmatpush1.msra.mxu0 0.0
      %1094 = vmatprep.mubr.f32.mxu0 0.0
      %v1095 = vand.u32 %v202, 4294901760
      %1096 = vmatmul.mubr.f32.gmra.mrb[0].mxu0 %v1095
      %v1097 = vpop.f32.mrb[0].mxu0
      %v1098 = vadd.f32 %v930, %v1097
      %v1099 = vpop.f32.mrb[0].mxu0
      %v1100 = vadd.f32 %v932, %v1099
      %1101 = vdwg.mxu0
      %v1102 = vand.u32 %v320, 4294901760
      %1103 = vmatprep.subr.mxu0 %v1102
      %v1104 = vand.u32 %v319, 4294901760
      %1105 = vmatpush1.msra.mxu0 %v1104
      %v1106 = vand.u32 %v322, 4294901760
      %1107 = vmatprep.subr.mxu0 %v1106
      %v1108 = vand.u32 %v321, 4294901760
      %1109 = vmatpush1.msra.mxu0 %v1108
      %v1110 = vand.u32 %v324, 4294901760
      %1111 = vmatprep.subr.mxu0 %v1110
      %v1112 = vand.u32 %v323, 4294901760
      %1113 = vmatpush1.msra.mxu0 %v1112
      %v1114 = vand.u32 %v326, 4294901760
      %1115 = vmatprep.subr.mxu0 %v1114
      %v1116 = vand.u32 %v325, 4294901760
      %1117 = vmatpush1.msra.mxu0 %v1116
      %v1118 = vand.u32 %v328, 4294901760
      %1119 = vmatprep.subr.mxu0 %v1118
      %v1120 = vand.u32 %v327, 4294901760
      %1121 = vmatpush1.msra.mxu0 %v1120
      %v1122 = vand.u32 %v330, 4294901760
      %1123 = vmatprep.subr.mxu0 %v1122
      %v1124 = vand.u32 %v329, 4294901760
      %1125 = vmatpush1.msra.mxu0 %v1124
      %v1126 = vand.u32 %v332, 4294901760
      %1127 = vmatprep.subr.mxu0 %v1126
      %v1128 = vand.u32 %v331, 4294901760
      %1129 = vmatpush1.msra.mxu0 %v1128
      %v1130 = vand.u32 %v334, 4294901760
      %1131 = vmatprep.subr.mxu0 %v1130
      %v1132 = vand.u32 %v333, 4294901760
      %1133 = vmatpush1.msra.mxu0 %v1132
      %v1134 = vand.u32 %v336, 4294901760
      %1135 = vmatprep.subr.mxu0 %v1134
      %v1136 = vand.u32 %v335, 4294901760
      %1137 = vmatpush1.msra.mxu0 %v1136
      %v1138 = vand.u32 %v338, 4294901760
      %1139 = vmatprep.subr.mxu0 %v1138
      %v1140 = vand.u32 %v337, 4294901760
      %1141 = vmatpush1.msra.mxu0 %v1140
      %v1142 = vand.u32 %v340, 4294901760
      %1143 = vmatprep.subr.mxu0 %v1142
      %v1144 = vand.u32 %v339, 4294901760
      %1145 = vmatpush1.msra.mxu0 %v1144
      %v1146 = vand.u32 %v342, 4294901760
      %1147 = vmatprep.subr.mxu0 %v1146
      %v1148 = vand.u32 %v341, 4294901760
      %1149 = vmatpush1.msra.mxu0 %v1148
      %v1150 = vand.u32 %v344, 4294901760
      %1151 = vmatprep.subr.mxu0 %v1150
      %v1152 = vand.u32 %v343, 4294901760
      %1153 = vmatpush1.msra.mxu0 %v1152
      %v1154 = vand.u32 %v346, 4294901760
      %1155 = vmatprep.subr.mxu0 %v1154
      %v1156 = vand.u32 %v345, 4294901760
      %1157 = vmatpush1.msra.mxu0 %v1156
      %v1158 = vand.u32 %v348, 4294901760
      %1159 = vmatprep.subr.mxu0 %v1158
      %v1160 = vand.u32 %v347, 4294901760
      %1161 = vmatpush1.msra.mxu0 %v1160
      %v1162 = vand.u32 %v350, 4294901760
      %1163 = vmatprep.subr.mxu0 %v1162
      %v1164 = vand.u32 %v349, 4294901760
      %1165 = vmatpush1.msra.mxu0 %v1164
      %1166 = vmatprep.subr.mxu0 0.0
      %1167 = vmatpush1.msra.mxu0 0.0
      %1168 = vmatprep.subr.mxu0 0.0
      %1169 = vmatpush1.msra.mxu0 0.0
      %1170 = vmatprep.subr.mxu0 0.0
      %1171 = vmatpush1.msra.mxu0 0.0
      %1172 = vmatprep.subr.mxu0 0.0
      %1173 = vmatpush1.msra.mxu0 0.0
      %1174 = vmatprep.subr.mxu0 0.0
      %1175 = vmatpush1.msra.mxu0 0.0
      %1176 = vmatprep.subr.mxu0 0.0
      %1177 = vmatpush1.msra.mxu0 0.0
      %1178 = vmatprep.subr.mxu0 0.0
      %1179 = vmatpush1.msra.mxu0 0.0
      %1180 = vmatprep.subr.mxu0 0.0
      %1181 = vmatpush1.msra.mxu0 0.0
      %1182 = vmatprep.subr.mxu0 0.0
      %1183 = vmatpush1.msra.mxu0 0.0
      %1184 = vmatprep.subr.mxu0 0.0
      %1185 = vmatpush1.msra.mxu0 0.0
      %1186 = vmatprep.subr.mxu0 0.0
      %1187 = vmatpush1.msra.mxu0 0.0
      %1188 = vmatprep.subr.mxu0 0.0
      %1189 = vmatpush1.msra.mxu0 0.0
      %1190 = vmatprep.subr.mxu0 0.0
      %1191 = vmatpush1.msra.mxu0 0.0
      %1192 = vmatprep.subr.mxu0 0.0
      %1193 = vmatpush1.msra.mxu0 0.0
      %1194 = vmatprep.subr.mxu0 0.0
      %1195 = vmatpush1.msra.mxu0 0.0
      %1196 = vmatprep.subr.mxu0 0.0
      %1197 = vmatpush1.msra.mxu0 0.0
      %1198 = vmatprep.mubr.f32.mxu0 0.0
      %v1199 = vand.u32 %v202, 4294901760
      %1200 = vmatmul.mubr.f32.gmra.mrb[0].mxu0 %v1199
      %v1201 = vpop.f32.mrb[0].mxu0
      %v1202 = vadd.f32 %v1098, %v1201
      %v1203 = vpop.f32.mrb[0].mxu0
      %v1204 = vadd.f32 %v1100, %v1203
      %1205 = vdwg.mxu0
      %v1208 = vcombine.low %v1202, %v1204
      %1210 = vst [vmem:[%s201] sm:$0xff] %v1208
      %p1211 = scmp.lt.s32.totalorder %s14, 1
      %s1212 = scalar_select %p1211, %s14, 1
      %s1213 = smul.addr %s1212, 2
      %s1214 = smul.addr %s1213, 4
      %s1215 = scalar_lea.vmem %s3, %s1214
      // Predicated region
      $region33: #{_voxelize_batch.5} parent=31 // pred_check
        %p1216 = pneg %p110
      $region34: #{_voxelize_batch.5} parent=31 // pred_check_branch
        %1218 = sbr.rel (%p1216) target = $region36
      $region35: #{_voxelize_batch.5} parent=31 // pred_region
        _
      $region36: #{_voxelize_batch.5} parent=31 // pred_fallthru
        _
    $region32: #{_voxelize_batch.5} parent=5 // pred_fallthru
      _
    %p1219 = scmp.le.s32.totalorder 2, %s9
    // Predicated region
    $region37: #{_voxelize_batch.5} parent=5 // pred_check
      %p1220 = pneg %p1219
    $region38: #{_voxelize_batch.5} parent=5 // pred_check_branch
      %1222 = sbr.rel (%p1220) target = $region40
    $region39: #{_voxelize_batch.5} parent=5 // pred_region
      %s1223 = ssub.s32 %s9, 2
      // Predicated region
      $region41: #{_voxelize_batch.5} parent=39 // pred_check
        %p1224 = pneg %p116
      $region42: #{_voxelize_batch.5} parent=39 // pred_check_branch
        %1226 = sbr.rel (%p1224) target = $region44
      $region43: #{_voxelize_batch.5} parent=39 // pred_region
        %p1227 = scmp.lt.s32.totalorder %s15, 1
        %s1228 = scalar_select %p1227, %s15, 1
        %s1229 = smul.addr %s1228, 2
        %s1230 = smul.addr %s1229, 4
        %s1231 = scalar_lea.vmem %s3, %s1230
      $region44: #{_voxelize_batch.5} parent=39 // pred_fallthru
        _
    $region40: #{_voxelize_batch.5} parent=5 // pred_fallthru
      _
  $region6: #{_voxelize_batch.5} parent=0 // loop_footer
    %s13 = sadd.s32 1, %s9
  $region7: #{_voxelize_batch.5} parent=0 // loop_footer_branch
    %8 = sbr.rel target = $region3
  $region8: #{_voxelize_batch.5} parent=0 // loop_exit
    _

</llo_original>
